<compile_context>
chip_gen: v6e
topology: v6e:2x2x1
jax: 0.10.0
libtpu: 0.0.40
codegen_flags: <defaults>
</compile_context>

<pallas_src>
import jax
import jax.numpy as jnp
from jax import lax
from jax.experimental import pallas as pl
from jax.experimental.pallas import tpu as pltpu

EPS_BN = 1e-5
EPS_STD = 1e-4


# ----------------------------------------------------------------------------
# In-kernel helpers (pure jnp on values)
# ----------------------------------------------------------------------------
def _bn_rows(h, gamma, beta):
    """BatchNorm1d (training mode) over the row axis of a 2D slab."""
    mu = jnp.mean(h, axis=0, keepdims=True)
    var = jnp.mean((h - mu) ** 2, axis=0, keepdims=True)
    return (h - mu) * lax.rsqrt(var + EPS_BN) * gamma + beta


def _pool_matrix(b, n):
    """(b, b*n) matrix that averages groups of n consecutive rows."""
    rows = lax.broadcasted_iota(jnp.int32, (b, b * n), 0)
    cols = lax.broadcasted_iota(jnp.int32, (b, b * n), 1)
    inside = (cols >= rows * n) & (cols < (rows + 1) * n)
    return jnp.where(inside, 1.0 / n, 0.0).astype(jnp.float32)


# ----------------------------------------------------------------------------
# Fused kernel factory
# ----------------------------------------------------------------------------
def make_vicreg_kernel(*, B, Nx, Ny, n_hidden, vec_offsets,
                       batch_size, num_features,
                       sim_coeff, std_coeff, cov_coeff):
    n_proj = n_hidden + 1

    def kernel(*refs):
        x_ref, y_ref, vec_ref, wxt_ref, wyt_ref, wxb_ref, wyb_ref = refs[:7]
        pw_refs = refs[7:7 + n_proj]
        o_ref = refs[7 + n_proj]

        def V(name):
            row, d = vec_offsets[name]           # static
            return vec_ref[row:row + 1, :d]      # (1, d)

        def transform_and_embed(x2d_ref, wt_ref, wb_ref, pre, n_seq):
            # transform: BN -> Linear -> BN -> ReLU over (B*n_seq, C) rows
            x = x2d_ref[...].astype(jnp.float32)
            h = _bn_rows(x, V(pre + "_g1"), V(pre + "_b1"))
            h = jnp.dot(h, wt_ref[...],
                        preferred_element_type=jnp.float32) + V(pre + "_bw")
            h = jnp.maximum(_bn_rows(h, V(pre + "_g2"), V(pre + "_b2")), 0.0)
            # Per-sample mean pool over the sequence axis via a sublane-
            # contracting matmul, then Linear -> ReLU.
            # TODO(synk): args.x_backbone / args.y_backbone are external modules
            # not defined in the reference file; this deterministic mean-pool +
            # Linear + ReLU backbone stands in for them.
            pooled = jnp.dot(_pool_matrix(B, n_seq), h,
                             preferred_element_type=jnp.float32)       # (B, Dt)
            emb = jnp.dot(pooled, wb_ref[...],
                          preferred_element_type=jnp.float32) + V(pre + "_bb")
            return jnp.maximum(emb, 0.0)                                 # (B, Do)

        def projector(h):
            # Note: projector is applied to x and y SEPARATELY (BN batch stats
            # are per-branch, as in the PyTorch module), so the two passes are
            # not stacked into one wider matmul.
            for i in range(n_hidden):
                h = jnp.dot(h, pw_refs[i][...],
                            preferred_element_type=jnp.float32) + V(f"p{i}_b")
                h = jnp.maximum(_bn_rows(h, V(f"p{i}_g"), V(f"p{i}_beta")), 0.0)
            return jnp.dot(h, pw_refs[n_hidden][...],
                           preferred_element_type=jnp.float32)

        zx = projector(transform_and_embed(x_ref, wxt_ref, wxb_ref, "xt", Nx))
        zy = projector(transform_and_embed(y_ref, wyt_ref, wyb_ref, "yt", Ny))

        # ----- VICReg loss -----
        repr_loss = jnp.mean((zx - zy) ** 2)

        xm = zx - jnp.mean(zx, axis=0, keepdims=True)
        ym = zy - jnp.mean(zy, axis=0, keepdims=True)

        colsq_x = jnp.sum(xm * xm, axis=0, keepdims=True)   # (1, F) = diag(xm^T xm)
        colsq_y = jnp.sum(ym * ym, axis=0, keepdims=True)

        # torch.var(dim=0) is unbiased -> / (B - 1)
        std_x = jnp.sqrt(colsq_x / (B - 1) + EPS_STD)
        std_y = jnp.sqrt(colsq_y / (B - 1) + EPS_STD)
        std_loss = (jnp.mean(jnp.maximum(1.0 - std_x, 0.0)) / 2.0
                    + jnp.mean(jnp.maximum(1.0 - std_y, 0.0)) / 2.0)

        # ||xm^T xm||_F^2 == ||xm xm^T||_F^2: contract the feature axis with
        # dot_general (B x B Gram), no transpose / no off-diagonal iota mask.
        dn = (((1,), (1,)), ((), ()))
        gx = lax.dot_general(xm, xm, dn, preferred_element_type=jnp.float32)
        gy = lax.dot_general(ym, ym, dn, preferred_element_type=jnp.float32)
        denom = float((batch_size - 1) ** 2 * num_features)
        cov_loss = ((jnp.sum(gx * gx) - jnp.sum(colsq_x * colsq_x))
                    + (jnp.sum(gy * gy) - jnp.sum(colsq_y * colsq_y))) / denom

        loss = sim_coeff * repr_loss + std_coeff * std_loss + cov_coeff * cov_loss
        o_ref[...] = loss * jnp.ones((1, 1), jnp.float32)

    return kernel


# ----------------------------------------------------------------------------
# Host-side wrapper
# ----------------------------------------------------------------------------
def _pack_vectors(named_vecs):
    """Pack many tiny 1-D params into one (n_vec, Dmax) f32 slab."""
    dmax = max(int(jnp.reshape(v, (-1,)).shape[0]) for _, v in named_vecs)
    rows, offsets = [], {}
    for i, (name, v) in enumerate(named_vecs):
        v = jnp.reshape(v, (-1,)).astype(jnp.float32)
        d = int(v.shape[0])
        offsets[name] = (i, d)
        rows.append(jnp.pad(v, (0, dmax - d)))
    return jnp.stack(rows, axis=0), offsets


def vicreg_forward(x, y, params, cfg):
    B = x.shape[0]
    Nx, Ny = cfg["N_x"], cfg["N_y"]
    Cx, Cy = cfg["x_inputs"], cfg["y_inputs"]

    # One-time layout change on the raw inputs only (a few KB); everything
    # downstream stays inside the single fused kernel / VMEM.
    x2d = jnp.transpose(x, (0, 2, 1)).reshape(B * Nx, Cx)
    y2d = jnp.transpose(y, (0, 2, 1)).reshape(B * Ny, Cy)

    xt, yt = params["x_transform"], params["y_transform"]
    xb, yb = params["x_backbone"], params["y_backbone"]
    proj = params["projector"]
    n_hidden = len(proj["hidden"])

    named = [
        ("xt_g1", xt["g1"]), ("xt_b1", xt["b1"]), ("xt_bw", xt["b"]),
        ("xt_g2", xt["g2"]), ("xt_b2", xt["b2"]),
        ("yt_g1", yt["g1"]), ("yt_b1", yt["b1"]), ("yt_bw", yt["b"]),
        ("yt_g2", yt["g2"]), ("yt_b2", yt["b2"]),
        ("xt_bb", xb["b"]), ("yt_bb", yb["b"]),
    ]
    for i, layer in enumerate(proj["hidden"]):
        named += [(f"p{i}_b", layer["b"]), (f"p{i}_g", layer["g"]),
                  (f"p{i}_beta", layer["beta"])]
    vec_slab, vec_offsets = _pack_vectors(named)

    weights = [xt["w"], yt["w"], xb["w"], yb["w"]]
    weights += [layer["w"] for layer in proj["hidden"]] + [proj["final"]]

    kernel = make_vicreg_kernel(
        B=B, Nx=Nx, Ny=Ny, n_hidden=n_hidden, vec_offsets=vec_offsets,
        batch_size=cfg["batch_size"], num_features=cfg["num_features"],
        sim_coeff=cfg["sim_coeff"], std_coeff=cfg["std_coeff"],
        cov_coeff=cfg["cov_coeff"])

    n_in = 3 + len(weights)
    loss = pl.pallas_call(
        kernel,
        out_shape=jax.ShapeDtypeStruct((1, 1), jnp.float32),
        in_specs=[pl.BlockSpec(memory_space=pltpu.MemorySpace.VMEM)
                  for _ in range(n_in)],
        out_specs=pl.BlockSpec(memory_space=pltpu.MemorySpace.VMEM),
    )(x2d, y2d, vec_slab, *weights)
    return loss[0, 0]


# ----------------------------------------------------------------------------
# Deterministic parameter construction
# ----------------------------------------------------------------------------
def init_linear(key, din, dout, bias=True):
    kw, kb = jax.random.split(key)
    bound = 1.0 / float(din) ** 0.5
    w = jax.random.uniform(kw, (din, dout), jnp.float32, -bound, bound)
    b = jax.random.uniform(kb, (dout,), jnp.float32, -bound, bound) if bias else None
    return w, b


def init_transform(key, din, dt):
    w, b = init_linear(key, din, dt)
    return {"g1": jnp.ones((din,), jnp.float32), "b1": jnp.zeros((din,), jnp.float32),
            "w": w, "b": b,
            "g2": jnp.ones((dt,), jnp.float32), "b2": jnp.zeros((dt,), jnp.float32)}


def init_backbone(key, dt, do):
    w, b = init_linear(key, dt, do)
    return {"w": w, "b": b}


def init_projector(key, dims):
    hidden = []
    keys = jax.random.split(key, len(dims))
    for i in range(len(dims) - 2):
        w, b = init_linear(keys[i], dims[i], dims[i + 1])
        hidden.append({"w": w, "b": b,
                       "g": jnp.ones((dims[i + 1],), jnp.float32),
                       "beta": jnp.zeros((dims[i + 1],), jnp.float32)})
    w_last, _ = init_linear(keys[-1], dims[-2], dims[-1], bias=False)
    return {"hidden": hidden, "final": w_last}


if __name__ == "__main__":
    cfg = {
        "batch_size": 8,
        "x_inputs": 6,
        "y_inputs": 5,
        "N_x": 8,
        "N_y": 10,
        "Dt": 16,        # transform_inputs
        "Do": 32,        # embedding
        "mlp": "32-16",  # projector spec -> dims [Do, 32, 16]
        "sim_coeff": 25.0,
        "std_coeff": 25.0,
        "cov_coeff": 1.0,
    }
    cfg["num_features"] = int(cfg["mlp"].split("-")[-1])
    proj_dims = [cfg["Do"]] + list(map(int, cfg["mlp"].split("-")))

    key = jax.random.PRNGKey(0)
    k_xt, k_yt, k_xb, k_yb, k_pr, k_x, k_y = jax.random.split(key, 7)

    params = {
        "x_transform": init_transform(k_xt, cfg["x_inputs"], cfg["Dt"]),
        "y_transform": init_transform(k_yt, cfg["y_inputs"], cfg["Dt"]),
        "x_backbone": init_backbone(k_xb, cfg["Dt"], cfg["Do"]),
        "y_backbone": init_backbone(k_yb, cfg["Dt"], cfg["Do"]),
        "projector": init_projector(k_pr, proj_dims),
    }

    B = cfg["batch_size"]
    x = jax.random.normal(k_x, (B, cfg["x_inputs"], cfg["N_x"]), jnp.float32)
    y = jax.random.normal(k_y, (B, cfg["y_inputs"], cfg["N_y"]), jnp.float32)

    fwd = jax.jit(lambda xx, yy: vicreg_forward(xx, yy, params, cfg))
    loss = fwd(x, y)
    jax.block_until_ready(loss)
    print("KERNEL_OK")
</pallas_src>

<mosaic_0001>
module attributes {stable_mosaic.version = 11 : i64} {
  func.func @kernel(%arg0: memref<64x6xf32, #tpu.memory_space<vmem>>, %arg1: memref<80x5xf32, #tpu.memory_space<vmem>>, %arg2: memref<15x32xf32, #tpu.memory_space<vmem>>, %arg3: memref<6x16xf32, #tpu.memory_space<vmem>>, %arg4: memref<5x16xf32, #tpu.memory_space<vmem>>, %arg5: memref<16x32xf32, #tpu.memory_space<vmem>>, %arg6: memref<16x32xf32, #tpu.memory_space<vmem>>, %arg7: memref<32x32xf32, #tpu.memory_space<vmem>>, %arg8: memref<32x16xf32, #tpu.memory_space<vmem>>, %arg9: memref<1x1xf32, #tpu.memory_space<vmem>>) attributes {dimension_semantics = [], scalar_prefetch = 0 : i64, scratch_operands = 0 : i64, tpu.core_type = #tpu.core_type<tc>} {
    %c0 = arith.constant 0 : index
    %c0_0 = arith.constant 0 : index
    %0 = vector.load %arg0[%c0, %c0_0] : memref<64x6xf32, #tpu.memory_space<vmem>>, vector<64x6xf32>
    %c0_1 = arith.constant 0 : index
    %c0_2 = arith.constant 0 : index
    %1 = vector.load %arg2[%c0_1, %c0_2] : memref<15x32xf32, #tpu.memory_space<vmem>>, vector<1x6xf32>
    %c1 = arith.constant 1 : index
    %c0_3 = arith.constant 0 : index
    %2 = vector.load %arg2[%c1, %c0_3] : memref<15x32xf32, #tpu.memory_space<vmem>>, vector<1x6xf32>
    %cst = arith.constant dense<0.000000e+00> : vector<6xf32>
    %3 = vector.multi_reduction <add>, %0, %cst [0] : vector<64x6xf32> to vector<6xf32>
    %4 = vector.shape_cast %3 : vector<6xf32> to vector<1x6xf32>
    %cst_4 = arith.constant 6.400000e+01 : f32
    %5 = vector.broadcast %cst_4 : f32 to vector<1x6xf32>
    %6 = arith.divf %4, %5 : vector<1x6xf32>
    %7 = vector.broadcast %6 : vector<1x6xf32> to vector<64x6xf32>
    %8 = arith.subf %0, %7 : vector<64x6xf32>
    %9 = arith.mulf %8, %8 : vector<64x6xf32>
    %cst_5 = arith.constant dense<0.000000e+00> : vector<6xf32>
    %10 = vector.multi_reduction <add>, %9, %cst_5 [0] : vector<64x6xf32> to vector<6xf32>
    %11 = vector.shape_cast %10 : vector<6xf32> to vector<1x6xf32>
    %cst_6 = arith.constant 6.400000e+01 : f32
    %12 = vector.broadcast %cst_6 : f32 to vector<1x6xf32>
    %13 = arith.divf %11, %12 : vector<1x6xf32>
    %14 = vector.broadcast %6 : vector<1x6xf32> to vector<64x6xf32>
    %15 = arith.subf %0, %14 : vector<64x6xf32>
    %cst_7 = arith.constant 9.99999974E-6 : f32
    %16 = vector.broadcast %cst_7 : f32 to vector<1x6xf32>
    %17 = arith.addf %13, %16 : vector<1x6xf32>
    %18 = math.rsqrt %17 : vector<1x6xf32>
    %19 = vector.broadcast %18 : vector<1x6xf32> to vector<64x6xf32>
    %20 = arith.mulf %15, %19 : vector<64x6xf32>
    %21 = vector.broadcast %1 : vector<1x6xf32> to vector<64x6xf32>
    %22 = arith.mulf %20, %21 : vector<64x6xf32>
    %23 = vector.broadcast %2 : vector<1x6xf32> to vector<64x6xf32>
    %24 = arith.addf %22, %23 : vector<64x6xf32>
    %c0_8 = arith.constant 0 : index
    %c0_9 = arith.constant 0 : index
    %25 = vector.load %arg3[%c0_8, %c0_9] : memref<6x16xf32, #tpu.memory_space<vmem>>, vector<6x16xf32>
    %cst_10 = arith.constant dense<0.000000e+00> : vector<64x16xf32>
    %26 = tpu.matmul %24, %25, %cst_10 {dimension_numbers = #tpu.dot_dimension_numbers<[1], [0], [0], [1], [0, 0, 1, 1], [], []>} : vector<64x6xf32>, vector<6x16xf32>, vector<64x16xf32> -> vector<64x16xf32>
    %c2 = arith.constant 2 : index
    %c0_11 = arith.constant 0 : index
    %27 = vector.load %arg2[%c2, %c0_11] : memref<15x32xf32, #tpu.memory_space<vmem>>, vector<1x16xf32>
    %28 = vector.broadcast %27 : vector<1x16xf32> to vector<64x16xf32>
    %29 = arith.addf %26, %28 : vector<64x16xf32>
    %c3 = arith.constant 3 : index
    %c0_12 = arith.constant 0 : index
    %30 = vector.load %arg2[%c3, %c0_12] : memref<15x32xf32, #tpu.memory_space<vmem>>, vector<1x16xf32>
    %c4 = arith.constant 4 : index
    %c0_13 = arith.constant 0 : index
    %31 = vector.load %arg2[%c4, %c0_13] : memref<15x32xf32, #tpu.memory_space<vmem>>, vector<1x16xf32>
    %cst_14 = arith.constant dense<0.000000e+00> : vector<16xf32>
    %32 = vector.multi_reduction <add>, %29, %cst_14 [0] : vector<64x16xf32> to vector<16xf32>
    %33 = vector.shape_cast %32 : vector<16xf32> to vector<1x16xf32>
    %cst_15 = arith.constant 6.400000e+01 : f32
    %34 = vector.broadcast %cst_15 : f32 to vector<1x16xf32>
    %35 = arith.divf %33, %34 : vector<1x16xf32>
    %36 = vector.broadcast %35 : vector<1x16xf32> to vector<64x16xf32>
    %37 = arith.subf %29, %36 : vector<64x16xf32>
    %38 = arith.mulf %37, %37 : vector<64x16xf32>
    %cst_16 = arith.constant dense<0.000000e+00> : vector<16xf32>
    %39 = vector.multi_reduction <add>, %38, %cst_16 [0] : vector<64x16xf32> to vector<16xf32>
    %40 = vector.shape_cast %39 : vector<16xf32> to vector<1x16xf32>
    %cst_17 = arith.constant 6.400000e+01 : f32
    %41 = vector.broadcast %cst_17 : f32 to vector<1x16xf32>
    %42 = arith.divf %40, %41 : vector<1x16xf32>
    %43 = vector.broadcast %35 : vector<1x16xf32> to vector<64x16xf32>
    %44 = arith.subf %29, %43 : vector<64x16xf32>
    %cst_18 = arith.constant 9.99999974E-6 : f32
    %45 = vector.broadcast %cst_18 : f32 to vector<1x16xf32>
    %46 = arith.addf %42, %45 : vector<1x16xf32>
    %47 = math.rsqrt %46 : vector<1x16xf32>
    %48 = vector.broadcast %47 : vector<1x16xf32> to vector<64x16xf32>
    %49 = arith.mulf %44, %48 : vector<64x16xf32>
    %50 = vector.broadcast %30 : vector<1x16xf32> to vector<64x16xf32>
    %51 = arith.mulf %49, %50 : vector<64x16xf32>
    %52 = vector.broadcast %31 : vector<1x16xf32> to vector<64x16xf32>
    %53 = arith.addf %51, %52 : vector<64x16xf32>
    %cst_19 = arith.constant 0.000000e+00 : f32
    %54 = vector.broadcast %cst_19 : f32 to vector<64x16xf32>
    %55 = arith.maximumf %53, %54 : vector<64x16xf32>
    %56 = tpu.iota {dimensions = array<i32: 0>} : vector<8x64xi32>
    %57 = tpu.iota {dimensions = array<i32: 1>} : vector<8x64xi32>
    %c8_i32 = arith.constant 8 : i32
    %58 = vector.broadcast %c8_i32 : i32 to vector<8x64xi32>
    %59 = arith.muli %56, %58 : vector<8x64xi32>
    %60 = arith.cmpi sge, %57, %59 : vector<8x64xi32>
    %c1_i32 = arith.constant 1 : i32
    %61 = vector.broadcast %c1_i32 : i32 to vector<8x64xi32>
    %62 = arith.addi %56, %61 : vector<8x64xi32>
    %c8_i32_20 = arith.constant 8 : i32
    %63 = vector.broadcast %c8_i32_20 : i32 to vector<8x64xi32>
    %64 = arith.muli %62, %63 : vector<8x64xi32>
    %65 = arith.cmpi slt, %57, %64 : vector<8x64xi32>
    %66 = arith.andi %60, %65 : vector<8x64xi1>
    %cst_21 = arith.constant 1.250000e-01 : f32
    %cst_22 = arith.constant 0.000000e+00 : f32
    %67 = vector.broadcast %cst_21 : f32 to vector<8x64xf32>
    %68 = vector.broadcast %cst_22 : f32 to vector<8x64xf32>
    %69 = arith.select %66, %67, %68 : vector<8x64xi1>, vector<8x64xf32>
    %cst_23 = arith.constant dense<0.000000e+00> : vector<8x16xf32>
    %70 = tpu.matmul %69, %55, %cst_23 {dimension_numbers = #tpu.dot_dimension_numbers<[1], [0], [0], [1], [0, 0, 1, 1], [], []>} : vector<8x64xf32>, vector<64x16xf32>, vector<8x16xf32> -> vector<8x16xf32>
    %c0_24 = arith.constant 0 : index
    %c0_25 = arith.constant 0 : index
    %71 = vector.load %arg5[%c0_24, %c0_25] : memref<16x32xf32, #tpu.memory_space<vmem>>, vector<16x32xf32>
    %cst_26 = arith.constant dense<0.000000e+00> : vector<8x32xf32>
    %72 = tpu.matmul %70, %71, %cst_26 {dimension_numbers = #tpu.dot_dimension_numbers<[1], [0], [0], [1], [0, 0, 1, 1], [], []>} : vector<8x16xf32>, vector<16x32xf32>, vector<8x32xf32> -> vector<8x32xf32>
    %c10 = arith.constant 10 : index
    %c0_27 = arith.constant 0 : index
    %73 = vector.load %arg2[%c10, %c0_27] : memref<15x32xf32, #tpu.memory_space<vmem>>, vector<1x32xf32>
    %74 = vector.broadcast %73 : vector<1x32xf32> to vector<8x32xf32>
    %75 = arith.addf %72, %74 : vector<8x32xf32>
    %cst_28 = arith.constant 0.000000e+00 : f32
    %76 = vector.broadcast %cst_28 : f32 to vector<8x32xf32>
    %77 = arith.maximumf %75, %76 : vector<8x32xf32>
    %c0_29 = arith.constant 0 : index
    %c0_30 = arith.constant 0 : index
    %78 = vector.load %arg7[%c0_29, %c0_30] : memref<32x32xf32, #tpu.memory_space<vmem>>, vector<32x32xf32>
    %cst_31 = arith.constant dense<0.000000e+00> : vector<8x32xf32>
    %79 = tpu.matmul %77, %78, %cst_31 {dimension_numbers = #tpu.dot_dimension_numbers<[1], [0], [0], [1], [0, 0, 1, 1], [], []>} : vector<8x32xf32>, vector<32x32xf32>, vector<8x32xf32> -> vector<8x32xf32>
    %c12 = arith.constant 12 : index
    %c0_32 = arith.constant 0 : index
    %80 = vector.load %arg2[%c12, %c0_32] : memref<15x32xf32, #tpu.memory_space<vmem>>, vector<1x32xf32>
    %81 = vector.broadcast %80 : vector<1x32xf32> to vector<8x32xf32>
    %82 = arith.addf %79, %81 : vector<8x32xf32>
    %c13 = arith.constant 13 : index
    %c0_33 = arith.constant 0 : index
    %83 = vector.load %arg2[%c13, %c0_33] : memref<15x32xf32, #tpu.memory_space<vmem>>, vector<1x32xf32>
    %c14 = arith.constant 14 : index
    %c0_34 = arith.constant 0 : index
    %84 = vector.load %arg2[%c14, %c0_34] : memref<15x32xf32, #tpu.memory_space<vmem>>, vector<1x32xf32>
    %cst_35 = arith.constant dense<0.000000e+00> : vector<32xf32>
    %85 = vector.multi_reduction <add>, %82, %cst_35 [0] : vector<8x32xf32> to vector<32xf32>
    %86 = vector.shape_cast %85 : vector<32xf32> to vector<1x32xf32>
    %cst_36 = arith.constant 8.000000e+00 : f32
    %87 = vector.broadcast %cst_36 : f32 to vector<1x32xf32>
    %88 = arith.divf %86, %87 : vector<1x32xf32>
    %89 = vector.broadcast %88 : vector<1x32xf32> to vector<8x32xf32>
    %90 = arith.subf %82, %89 : vector<8x32xf32>
    %91 = arith.mulf %90, %90 : vector<8x32xf32>
    %cst_37 = arith.constant dense<0.000000e+00> : vector<32xf32>
    %92 = vector.multi_reduction <add>, %91, %cst_37 [0] : vector<8x32xf32> to vector<32xf32>
    %93 = vector.shape_cast %92 : vector<32xf32> to vector<1x32xf32>
    %cst_38 = arith.constant 8.000000e+00 : f32
    %94 = vector.broadcast %cst_38 : f32 to vector<1x32xf32>
    %95 = arith.divf %93, %94 : vector<1x32xf32>
    %96 = vector.broadcast %88 : vector<1x32xf32> to vector<8x32xf32>
    %97 = arith.subf %82, %96 : vector<8x32xf32>
    %cst_39 = arith.constant 9.99999974E-6 : f32
    %98 = vector.broadcast %cst_39 : f32 to vector<1x32xf32>
    %99 = arith.addf %95, %98 : vector<1x32xf32>
    %100 = math.rsqrt %99 : vector<1x32xf32>
    %101 = vector.broadcast %100 : vector<1x32xf32> to vector<8x32xf32>
    %102 = arith.mulf %97, %101 : vector<8x32xf32>
    %103 = vector.broadcast %83 : vector<1x32xf32> to vector<8x32xf32>
    %104 = arith.mulf %102, %103 : vector<8x32xf32>
    %105 = vector.broadcast %84 : vector<1x32xf32> to vector<8x32xf32>
    %106 = arith.addf %104, %105 : vector<8x32xf32>
    %cst_40 = arith.constant 0.000000e+00 : f32
    %107 = vector.broadcast %cst_40 : f32 to vector<8x32xf32>
    %108 = arith.maximumf %106, %107 : vector<8x32xf32>
    %c0_41 = arith.constant 0 : index
    %c0_42 = arith.constant 0 : index
    %109 = vector.load %arg8[%c0_41, %c0_42] : memref<32x16xf32, #tpu.memory_space<vmem>>, vector<32x16xf32>
    %cst_43 = arith.constant dense<0.000000e+00> : vector<8x16xf32>
    %110 = tpu.matmul %108, %109, %cst_43 {dimension_numbers = #tpu.dot_dimension_numbers<[1], [0], [0], [1], [0, 0, 1, 1], [], []>} : vector<8x32xf32>, vector<32x16xf32>, vector<8x16xf32> -> vector<8x16xf32>
    %c0_44 = arith.constant 0 : index
    %c0_45 = arith.constant 0 : index
    %111 = vector.load %arg1[%c0_44, %c0_45] : memref<80x5xf32, #tpu.memory_space<vmem>>, vector<80x5xf32>
    %c5 = arith.constant 5 : index
    %c0_46 = arith.constant 0 : index
    %112 = vector.load %arg2[%c5, %c0_46] : memref<15x32xf32, #tpu.memory_space<vmem>>, vector<1x5xf32>
    %c6 = arith.constant 6 : index
    %c0_47 = arith.constant 0 : index
    %113 = vector.load %arg2[%c6, %c0_47] : memref<15x32xf32, #tpu.memory_space<vmem>>, vector<1x5xf32>
    %cst_48 = arith.constant dense<0.000000e+00> : vector<5xf32>
    %114 = vector.multi_reduction <add>, %111, %cst_48 [0] : vector<80x5xf32> to vector<5xf32>
    %115 = vector.shape_cast %114 : vector<5xf32> to vector<1x5xf32>
    %cst_49 = arith.constant 8.000000e+01 : f32
    %116 = vector.broadcast %cst_49 : f32 to vector<1x5xf32>
    %117 = arith.divf %115, %116 : vector<1x5xf32>
    %118 = vector.broadcast %117 : vector<1x5xf32> to vector<80x5xf32>
    %119 = arith.subf %111, %118 : vector<80x5xf32>
    %120 = arith.mulf %119, %119 : vector<80x5xf32>
    %cst_50 = arith.constant dense<0.000000e+00> : vector<5xf32>
    %121 = vector.multi_reduction <add>, %120, %cst_50 [0] : vector<80x5xf32> to vector<5xf32>
    %122 = vector.shape_cast %121 : vector<5xf32> to vector<1x5xf32>
    %cst_51 = arith.constant 8.000000e+01 : f32
    %123 = vector.broadcast %cst_51 : f32 to vector<1x5xf32>
    %124 = arith.divf %122, %123 : vector<1x5xf32>
    %125 = vector.broadcast %117 : vector<1x5xf32> to vector<80x5xf32>
    %126 = arith.subf %111, %125 : vector<80x5xf32>
    %cst_52 = arith.constant 9.99999974E-6 : f32
    %127 = vector.broadcast %cst_52 : f32 to vector<1x5xf32>
    %128 = arith.addf %124, %127 : vector<1x5xf32>
    %129 = math.rsqrt %128 : vector<1x5xf32>
    %130 = vector.broadcast %129 : vector<1x5xf32> to vector<80x5xf32>
    %131 = arith.mulf %126, %130 : vector<80x5xf32>
    %132 = vector.broadcast %112 : vector<1x5xf32> to vector<80x5xf32>
    %133 = arith.mulf %131, %132 : vector<80x5xf32>
    %134 = vector.broadcast %113 : vector<1x5xf32> to vector<80x5xf32>
    %135 = arith.addf %133, %134 : vector<80x5xf32>
    %c0_53 = arith.constant 0 : index
    %c0_54 = arith.constant 0 : index
    %136 = vector.load %arg4[%c0_53, %c0_54] : memref<5x16xf32, #tpu.memory_space<vmem>>, vector<5x16xf32>
    %cst_55 = arith.constant dense<0.000000e+00> : vector<80x16xf32>
    %137 = tpu.matmul %135, %136, %cst_55 {dimension_numbers = #tpu.dot_dimension_numbers<[1], [0], [0], [1], [0, 0, 1, 1], [], []>} : vector<80x5xf32>, vector<5x16xf32>, vector<80x16xf32> -> vector<80x16xf32>
    %c7 = arith.constant 7 : index
    %c0_56 = arith.constant 0 : index
    %138 = vector.load %arg2[%c7, %c0_56] : memref<15x32xf32, #tpu.memory_space<vmem>>, vector<1x16xf32>
    %139 = vector.broadcast %138 : vector<1x16xf32> to vector<80x16xf32>
    %140 = arith.addf %137, %139 : vector<80x16xf32>
    %c8 = arith.constant 8 : index
    %c0_57 = arith.constant 0 : index
    %141 = vector.load %arg2[%c8, %c0_57] : memref<15x32xf32, #tpu.memory_space<vmem>>, vector<1x16xf32>
    %c9 = arith.constant 9 : index
    %c0_58 = arith.constant 0 : index
    %142 = vector.load %arg2[%c9, %c0_58] : memref<15x32xf32, #tpu.memory_space<vmem>>, vector<1x16xf32>
    %cst_59 = arith.constant dense<0.000000e+00> : vector<16xf32>
    %143 = vector.multi_reduction <add>, %140, %cst_59 [0] : vector<80x16xf32> to vector<16xf32>
    %144 = vector.shape_cast %143 : vector<16xf32> to vector<1x16xf32>
    %cst_60 = arith.constant 8.000000e+01 : f32
    %145 = vector.broadcast %cst_60 : f32 to vector<1x16xf32>
    %146 = arith.divf %144, %145 : vector<1x16xf32>
    %147 = vector.broadcast %146 : vector<1x16xf32> to vector<80x16xf32>
    %148 = arith.subf %140, %147 : vector<80x16xf32>
    %149 = arith.mulf %148, %148 : vector<80x16xf32>
    %cst_61 = arith.constant dense<0.000000e+00> : vector<16xf32>
    %150 = vector.multi_reduction <add>, %149, %cst_61 [0] : vector<80x16xf32> to vector<16xf32>
    %151 = vector.shape_cast %150 : vector<16xf32> to vector<1x16xf32>
    %cst_62 = arith.constant 8.000000e+01 : f32
    %152 = vector.broadcast %cst_62 : f32 to vector<1x16xf32>
    %153 = arith.divf %151, %152 : vector<1x16xf32>
    %154 = vector.broadcast %146 : vector<1x16xf32> to vector<80x16xf32>
    %155 = arith.subf %140, %154 : vector<80x16xf32>
    %cst_63 = arith.constant 9.99999974E-6 : f32
    %156 = vector.broadcast %cst_63 : f32 to vector<1x16xf32>
    %157 = arith.addf %153, %156 : vector<1x16xf32>
    %158 = math.rsqrt %157 : vector<1x16xf32>
    %159 = vector.broadcast %158 : vector<1x16xf32> to vector<80x16xf32>
    %160 = arith.mulf %155, %159 : vector<80x16xf32>
    %161 = vector.broadcast %141 : vector<1x16xf32> to vector<80x16xf32>
    %162 = arith.mulf %160, %161 : vector<80x16xf32>
    %163 = vector.broadcast %142 : vector<1x16xf32> to vector<80x16xf32>
    %164 = arith.addf %162, %163 : vector<80x16xf32>
    %cst_64 = arith.constant 0.000000e+00 : f32
    %165 = vector.broadcast %cst_64 : f32 to vector<80x16xf32>
    %166 = arith.maximumf %164, %165 : vector<80x16xf32>
    %167 = tpu.iota {dimensions = array<i32: 0>} : vector<8x80xi32>
    %168 = tpu.iota {dimensions = array<i32: 1>} : vector<8x80xi32>
    %c10_i32 = arith.constant 10 : i32
    %169 = vector.broadcast %c10_i32 : i32 to vector<8x80xi32>
    %170 = arith.muli %167, %169 : vector<8x80xi32>
    %171 = arith.cmpi sge, %168, %170 : vector<8x80xi32>
    %c1_i32_65 = arith.constant 1 : i32
    %172 = vector.broadcast %c1_i32_65 : i32 to vector<8x80xi32>
    %173 = arith.addi %167, %172 : vector<8x80xi32>
    %c10_i32_66 = arith.constant 10 : i32
    %174 = vector.broadcast %c10_i32_66 : i32 to vector<8x80xi32>
    %175 = arith.muli %173, %174 : vector<8x80xi32>
    %176 = arith.cmpi slt, %168, %175 : vector<8x80xi32>
    %177 = arith.andi %171, %176 : vector<8x80xi1>
    %cst_67 = arith.constant 1.000000e-01 : f32
    %cst_68 = arith.constant 0.000000e+00 : f32
    %178 = vector.broadcast %cst_67 : f32 to vector<8x80xf32>
    %179 = vector.broadcast %cst_68 : f32 to vector<8x80xf32>
    %180 = arith.select %177, %178, %179 : vector<8x80xi1>, vector<8x80xf32>
    %cst_69 = arith.constant dense<0.000000e+00> : vector<8x16xf32>
    %181 = tpu.matmul %180, %166, %cst_69 {dimension_numbers = #tpu.dot_dimension_numbers<[1], [0], [0], [1], [0, 0, 1, 1], [], []>} : vector<8x80xf32>, vector<80x16xf32>, vector<8x16xf32> -> vector<8x16xf32>
    %c0_70 = arith.constant 0 : index
    %c0_71 = arith.constant 0 : index
    %182 = vector.load %arg6[%c0_70, %c0_71] : memref<16x32xf32, #tpu.memory_space<vmem>>, vector<16x32xf32>
    %cst_72 = arith.constant dense<0.000000e+00> : vector<8x32xf32>
    %183 = tpu.matmul %181, %182, %cst_72 {dimension_numbers = #tpu.dot_dimension_numbers<[1], [0], [0], [1], [0, 0, 1, 1], [], []>} : vector<8x16xf32>, vector<16x32xf32>, vector<8x32xf32> -> vector<8x32xf32>
    %c11 = arith.constant 11 : index
    %c0_73 = arith.constant 0 : index
    %184 = vector.load %arg2[%c11, %c0_73] : memref<15x32xf32, #tpu.memory_space<vmem>>, vector<1x32xf32>
    %185 = vector.broadcast %184 : vector<1x32xf32> to vector<8x32xf32>
    %186 = arith.addf %183, %185 : vector<8x32xf32>
    %cst_74 = arith.constant 0.000000e+00 : f32
    %187 = vector.broadcast %cst_74 : f32 to vector<8x32xf32>
    %188 = arith.maximumf %186, %187 : vector<8x32xf32>
    %c0_75 = arith.constant 0 : index
    %c0_76 = arith.constant 0 : index
    %189 = vector.load %arg7[%c0_75, %c0_76] : memref<32x32xf32, #tpu.memory_space<vmem>>, vector<32x32xf32>
    %cst_77 = arith.constant dense<0.000000e+00> : vector<8x32xf32>
    %190 = tpu.matmul %188, %189, %cst_77 {dimension_numbers = #tpu.dot_dimension_numbers<[1], [0], [0], [1], [0, 0, 1, 1], [], []>} : vector<8x32xf32>, vector<32x32xf32>, vector<8x32xf32> -> vector<8x32xf32>
    %c12_78 = arith.constant 12 : index
    %c0_79 = arith.constant 0 : index
    %191 = vector.load %arg2[%c12_78, %c0_79] : memref<15x32xf32, #tpu.memory_space<vmem>>, vector<1x32xf32>
    %192 = vector.broadcast %191 : vector<1x32xf32> to vector<8x32xf32>
    %193 = arith.addf %190, %192 : vector<8x32xf32>
    %c13_80 = arith.constant 13 : index
    %c0_81 = arith.constant 0 : index
    %194 = vector.load %arg2[%c13_80, %c0_81] : memref<15x32xf32, #tpu.memory_space<vmem>>, vector<1x32xf32>
    %c14_82 = arith.constant 14 : index
    %c0_83 = arith.constant 0 : index
    %195 = vector.load %arg2[%c14_82, %c0_83] : memref<15x32xf32, #tpu.memory_space<vmem>>, vector<1x32xf32>
    %cst_84 = arith.constant dense<0.000000e+00> : vector<32xf32>
    %196 = vector.multi_reduction <add>, %193, %cst_84 [0] : vector<8x32xf32> to vector<32xf32>
    %197 = vector.shape_cast %196 : vector<32xf32> to vector<1x32xf32>
    %cst_85 = arith.constant 8.000000e+00 : f32
    %198 = vector.broadcast %cst_85 : f32 to vector<1x32xf32>
    %199 = arith.divf %197, %198 : vector<1x32xf32>
    %200 = vector.broadcast %199 : vector<1x32xf32> to vector<8x32xf32>
    %201 = arith.subf %193, %200 : vector<8x32xf32>
    %202 = arith.mulf %201, %201 : vector<8x32xf32>
    %cst_86 = arith.constant dense<0.000000e+00> : vector<32xf32>
    %203 = vector.multi_reduction <add>, %202, %cst_86 [0] : vector<8x32xf32> to vector<32xf32>
    %204 = vector.shape_cast %203 : vector<32xf32> to vector<1x32xf32>
    %cst_87 = arith.constant 8.000000e+00 : f32
    %205 = vector.broadcast %cst_87 : f32 to vector<1x32xf32>
    %206 = arith.divf %204, %205 : vector<1x32xf32>
    %207 = vector.broadcast %199 : vector<1x32xf32> to vector<8x32xf32>
    %208 = arith.subf %193, %207 : vector<8x32xf32>
    %cst_88 = arith.constant 9.99999974E-6 : f32
    %209 = vector.broadcast %cst_88 : f32 to vector<1x32xf32>
    %210 = arith.addf %206, %209 : vector<1x32xf32>
    %211 = math.rsqrt %210 : vector<1x32xf32>
    %212 = vector.broadcast %211 : vector<1x32xf32> to vector<8x32xf32>
    %213 = arith.mulf %208, %212 : vector<8x32xf32>
    %214 = vector.broadcast %194 : vector<1x32xf32> to vector<8x32xf32>
    %215 = arith.mulf %213, %214 : vector<8x32xf32>
    %216 = vector.broadcast %195 : vector<1x32xf32> to vector<8x32xf32>
    %217 = arith.addf %215, %216 : vector<8x32xf32>
    %cst_89 = arith.constant 0.000000e+00 : f32
    %218 = vector.broadcast %cst_89 : f32 to vector<8x32xf32>
    %219 = arith.maximumf %217, %218 : vector<8x32xf32>
    %c0_90 = arith.constant 0 : index
    %c0_91 = arith.constant 0 : index
    %220 = vector.load %arg8[%c0_90, %c0_91] : memref<32x16xf32, #tpu.memory_space<vmem>>, vector<32x16xf32>
    %cst_92 = arith.constant dense<0.000000e+00> : vector<8x16xf32>
    %221 = tpu.matmul %219, %220, %cst_92 {dimension_numbers = #tpu.dot_dimension_numbers<[1], [0], [0], [1], [0, 0, 1, 1], [], []>} : vector<8x32xf32>, vector<32x16xf32>, vector<8x16xf32> -> vector<8x16xf32>
    %222 = arith.subf %110, %221 : vector<8x16xf32>
    %223 = arith.mulf %222, %222 : vector<8x16xf32>
    %224 = vector.shape_cast %223 : vector<8x16xf32> to vector<1x8x16xf32>
    %cst_93 = arith.constant dense<0.000000e+00> : vector<1xf32>
    %225 = vector.multi_reduction <add>, %224, %cst_93 [1, 2] : vector<1x8x16xf32> to vector<1xf32>
    %226 = vector.shape_cast %225 : vector<1xf32> to vector<1x1x1xf32>
    %227 = vector.extract %226[0, 0, 0] : f32 from vector<1x1x1xf32>
    %cst_94 = arith.constant 1.280000e+02 : f32
    %228 = arith.divf %227, %cst_94 : f32
    %cst_95 = arith.constant dense<0.000000e+00> : vector<16xf32>
    %229 = vector.multi_reduction <add>, %110, %cst_95 [0] : vector<8x16xf32> to vector<16xf32>
    %230 = vector.shape_cast %229 : vector<16xf32> to vector<1x16xf32>
    %cst_96 = arith.constant 8.000000e+00 : f32
    %231 = vector.broadcast %cst_96 : f32 to vector<1x16xf32>
    %232 = arith.divf %230, %231 : vector<1x16xf32>
    %233 = vector.broadcast %232 : vector<1x16xf32> to vector<8x16xf32>
    %234 = arith.subf %110, %233 : vector<8x16xf32>
    %cst_97 = arith.constant dense<0.000000e+00> : vector<16xf32>
    %235 = vector.multi_reduction <add>, %221, %cst_97 [0] : vector<8x16xf32> to vector<16xf32>
    %236 = vector.shape_cast %235 : vector<16xf32> to vector<1x16xf32>
    %cst_98 = arith.constant 8.000000e+00 : f32
    %237 = vector.broadcast %cst_98 : f32 to vector<1x16xf32>
    %238 = arith.divf %236, %237 : vector<1x16xf32>
    %239 = vector.broadcast %238 : vector<1x16xf32> to vector<8x16xf32>
    %240 = arith.subf %221, %239 : vector<8x16xf32>
    %241 = arith.mulf %234, %234 : vector<8x16xf32>
    %cst_99 = arith.constant dense<0.000000e+00> : vector<16xf32>
    %242 = vector.multi_reduction <add>, %241, %cst_99 [0] : vector<8x16xf32> to vector<16xf32>
    %243 = vector.shape_cast %242 : vector<16xf32> to vector<1x16xf32>
    %244 = arith.mulf %240, %240 : vector<8x16xf32>
    %cst_100 = arith.constant dense<0.000000e+00> : vector<16xf32>
    %245 = vector.multi_reduction <add>, %244, %cst_100 [0] : vector<8x16xf32> to vector<16xf32>
    %246 = vector.shape_cast %245 : vector<16xf32> to vector<1x16xf32>
    %cst_101 = arith.constant 7.000000e+00 : f32
    %247 = vector.broadcast %cst_101 : f32 to vector<1x16xf32>
    %248 = arith.divf %243, %247 : vector<1x16xf32>
    %cst_102 = arith.constant 9.99999974E-5 : f32
    %249 = vector.broadcast %cst_102 : f32 to vector<1x16xf32>
    %250 = arith.addf %248, %249 : vector<1x16xf32>
    %251 = math.sqrt %250 : vector<1x16xf32>
    %cst_103 = arith.constant 7.000000e+00 : f32
    %252 = vector.broadcast %cst_103 : f32 to vector<1x16xf32>
    %253 = arith.divf %246, %252 : vector<1x16xf32>
    %cst_104 = arith.constant 9.99999974E-5 : f32
    %254 = vector.broadcast %cst_104 : f32 to vector<1x16xf32>
    %255 = arith.addf %253, %254 : vector<1x16xf32>
    %256 = math.sqrt %255 : vector<1x16xf32>
    %cst_105 = arith.constant 1.000000e+00 : f32
    %257 = vector.broadcast %cst_105 : f32 to vector<1x16xf32>
    %258 = arith.subf %257, %251 : vector<1x16xf32>
    %cst_106 = arith.constant 0.000000e+00 : f32
    %259 = vector.broadcast %cst_106 : f32 to vector<1x16xf32>
    %260 = arith.maximumf %258, %259 : vector<1x16xf32>
    %261 = vector.shape_cast %260 : vector<1x16xf32> to vector<1x1x16xf32>
    %cst_107 = arith.constant dense<0.000000e+00> : vector<1xf32>
    %262 = vector.multi_reduction <add>, %261, %cst_107 [1, 2] : vector<1x1x16xf32> to vector<1xf32>
    %263 = vector.shape_cast %262 : vector<1xf32> to vector<1x1x1xf32>
    %264 = vector.extract %263[0, 0, 0] : f32 from vector<1x1x1xf32>
    %cst_108 = arith.constant 1.600000e+01 : f32
    %265 = arith.divf %264, %cst_108 : f32
    %cst_109 = arith.constant 2.000000e+00 : f32
    %266 = arith.divf %265, %cst_109 : f32
    %cst_110 = arith.constant 1.000000e+00 : f32
    %267 = vector.broadcast %cst_110 : f32 to vector<1x16xf32>
    %268 = arith.subf %267, %256 : vector<1x16xf32>
    %cst_111 = arith.constant 0.000000e+00 : f32
    %269 = vector.broadcast %cst_111 : f32 to vector<1x16xf32>
    %270 = arith.maximumf %268, %269 : vector<1x16xf32>
    %271 = vector.shape_cast %270 : vector<1x16xf32> to vector<1x1x16xf32>
    %cst_112 = arith.constant dense<0.000000e+00> : vector<1xf32>
    %272 = vector.multi_reduction <add>, %271, %cst_112 [1, 2] : vector<1x1x16xf32> to vector<1xf32>
    %273 = vector.shape_cast %272 : vector<1xf32> to vector<1x1x1xf32>
    %274 = vector.extract %273[0, 0, 0] : f32 from vector<1x1x1xf32>
    %cst_113 = arith.constant 1.600000e+01 : f32
    %275 = arith.divf %274, %cst_113 : f32
    %cst_114 = arith.constant 2.000000e+00 : f32
    %276 = arith.divf %275, %cst_114 : f32
    %277 = arith.addf %266, %276 : f32
    %cst_115 = arith.constant dense<0.000000e+00> : vector<8x8xf32>
    %278 = tpu.matmul %234, %234, %cst_115 {dimension_numbers = #tpu.dot_dimension_numbers<[1], [1], [0], [0], [0, 0, 1, 0], [], []>} : vector<8x16xf32>, vector<8x16xf32>, vector<8x8xf32> -> vector<8x8xf32>
    %cst_116 = arith.constant dense<0.000000e+00> : vector<8x8xf32>
    %279 = tpu.matmul %240, %240, %cst_116 {dimension_numbers = #tpu.dot_dimension_numbers<[1], [1], [0], [0], [0, 0, 1, 0], [], []>} : vector<8x16xf32>, vector<8x16xf32>, vector<8x8xf32> -> vector<8x8xf32>
    %280 = arith.mulf %278, %278 : vector<8x8xf32>
    %281 = vector.shape_cast %280 : vector<8x8xf32> to vector<1x8x8xf32>
    %cst_117 = arith.constant dense<0.000000e+00> : vector<1xf32>
    %282 = vector.multi_reduction <add>, %281, %cst_117 [1, 2] : vector<1x8x8xf32> to vector<1xf32>
    %283 = vector.shape_cast %282 : vector<1xf32> to vector<1x1x1xf32>
    %284 = vector.extract %283[0, 0, 0] : f32 from vector<1x1x1xf32>
    %285 = arith.mulf %243, %243 : vector<1x16xf32>
    %286 = vector.shape_cast %285 : vector<1x16xf32> to vector<1x1x16xf32>
    %cst_118 = arith.constant dense<0.000000e+00> : vector<1xf32>
    %287 = vector.multi_reduction <add>, %286, %cst_118 [1, 2] : vector<1x1x16xf32> to vector<1xf32>
    %288 = vector.shape_cast %287 : vector<1xf32> to vector<1x1x1xf32>
    %289 = vector.extract %288[0, 0, 0] : f32 from vector<1x1x1xf32>
    %290 = arith.subf %284, %289 : f32
    %291 = arith.mulf %279, %279 : vector<8x8xf32>
    %292 = vector.shape_cast %291 : vector<8x8xf32> to vector<1x8x8xf32>
    %cst_119 = arith.constant dense<0.000000e+00> : vector<1xf32>
    %293 = vector.multi_reduction <add>, %292, %cst_119 [1, 2] : vector<1x8x8xf32> to vector<1xf32>
    %294 = vector.shape_cast %293 : vector<1xf32> to vector<1x1x1xf32>
    %295 = vector.extract %294[0, 0, 0] : f32 from vector<1x1x1xf32>
    %296 = arith.mulf %246, %246 : vector<1x16xf32>
    %297 = vector.shape_cast %296 : vector<1x16xf32> to vector<1x1x16xf32>
    %cst_120 = arith.constant dense<0.000000e+00> : vector<1xf32>
    %298 = vector.multi_reduction <add>, %297, %cst_120 [1, 2] : vector<1x1x16xf32> to vector<1xf32>
    %299 = vector.shape_cast %298 : vector<1xf32> to vector<1x1x1xf32>
    %300 = vector.extract %299[0, 0, 0] : f32 from vector<1x1x1xf32>
    %301 = arith.subf %295, %300 : f32
    %302 = arith.addf %290, %301 : f32
    %cst_121 = arith.constant 7.840000e+02 : f32
    %303 = arith.divf %302, %cst_121 : f32
    %cst_122 = arith.constant 2.500000e+01 : f32
    %304 = arith.mulf %cst_122, %228 : f32
    %cst_123 = arith.constant 2.500000e+01 : f32
    %305 = arith.mulf %cst_123, %277 : f32
    %306 = arith.addf %304, %305 : f32
    %cst_124 = arith.constant 1.000000e+00 : f32
    %307 = arith.mulf %cst_124, %303 : f32
    %308 = arith.addf %306, %307 : f32
    %cst_125 = arith.constant 1.000000e+00 : f32
    %309 = vector.broadcast %cst_125 : f32 to vector<1x1xf32>
    %310 = vector.broadcast %308 : f32 to vector<1x1xf32>
    %311 = arith.mulf %310, %309 : vector<1x1xf32>
    %c0_126 = arith.constant 0 : index
    %c0_127 = arith.constant 0 : index
    %312 = vector.load %arg9[%c0_126, %c0_127] : memref<1x1xf32, #tpu.memory_space<vmem>>, vector<1x1xf32>
    tpu.vector_store %arg9[%c0_126, %c0_127], %311 {strides = array<i32>} : memref<1x1xf32, #tpu.memory_space<vmem>>, vector<1x1xf32>,
    return
  }
}

</mosaic_0001>

<llo_original>
// kernel: _lambda_.1
$region0: #{_lambda_.1}
  #allocation0 [shape = 'u32[]', space=smem, size = 0x4, offset = 0x4, fixed_abs, tag = 'smem constant byte address 0x4 - core index']
  #allocation1 [shape = 'u32[144,128]{1,0:T(1,128)}', space=vmem, size = 0x12000, scoped, tag = 'internal scratch']
  %s0 = inlined_call_operand.vmem [shape: f32[64,6], index: 0, kind: input, shape index: {}]
  %s1 = inlined_call_operand.vmem [shape: f32[80,5], index: 1, kind: input, shape index: {}]
  %s2 = inlined_call_operand.vmem [shape: f32[15,32], index: 2, kind: input, shape index: {}]
  %s3 = inlined_call_operand.vmem [shape: f32[6,16], index: 3, kind: input, shape index: {}]
  %s4 = inlined_call_operand.vmem [shape: f32[5,16], index: 4, kind: input, shape index: {}]
  %s5 = inlined_call_operand.vmem [shape: f32[16,32], index: 5, kind: input, shape index: {}]
  %s6 = inlined_call_operand.vmem [shape: f32[16,32], index: 6, kind: input, shape index: {}]
  %s7 = inlined_call_operand.vmem [shape: f32[32,32], index: 7, kind: input, shape index: {}]
  %s8 = inlined_call_operand.vmem [shape: f32[32,16], index: 8, kind: input, shape index: {}]
  %s9 = inlined_call_operand.hbm [shape: f32[1,1], index: 9, kind: output, shape index: {}]
  %s10 = sld [smem:[#allocation0]]
  $region46: #{_lambda_.1} parent=0
    _
  %s12 = ssub.s32 1, %s10
  %s13 = scalar_select 0, %s12, %s10
  $region1: #{_lambda_.1} parent=0
    #allocation2 [shape = 'u8[512]{0}', space=vmem, size = 0x400, scoped, tag = 'output window, operand 0, single buffered']
    #allocation3 [shape = 's32[1]{0}', space=sflag, size = 0x4, scoped, tag = 'scoped memory for _lambda_.1']
    %14 = vsyncpa [#allocation3], 0
    // Predicated region
    $region2: #{_lambda_.1} parent=1 // pred_check
      _
    $region3: #{_lambda_.1} parent=1 // pred_check_branch
      %16 = sbr.rel (0) target = $region5
    $region4: #{_lambda_.1} parent=1 // pred_region
      _
    $region5: #{_lambda_.1} parent=1 // pred_fallthru
      _
    // Predicated region
    $region6: #{_lambda_.1} parent=1 // pred_check
      _
    $region7: #{_lambda_.1} parent=1 // pred_check_branch
      %18 = sbr.rel (0) target = $region9
    $region8: #{_lambda_.1} parent=1 // pred_region
      _
    $region9: #{_lambda_.1} parent=1 // pred_fallthru
      _
    // Predicated region
    $region10: #{_lambda_.1} parent=1 // pred_check
      _
    $region11: #{_lambda_.1} parent=1 // pred_check_branch
      %20 = sbr.rel (0) target = $region13
    $region12: #{_lambda_.1} parent=1 // pred_region
      _
    $region13: #{_lambda_.1} parent=1 // pred_fallthru
      _
    // Predicated region
    $region14: #{_lambda_.1} parent=1 // pred_check
      _
    $region15: #{_lambda_.1} parent=1 // pred_check_branch
      %22 = sbr.rel (0) target = $region17
    $region16: #{_lambda_.1} parent=1 // pred_region
      _
    $region17: #{_lambda_.1} parent=1 // pred_fallthru
      _
    // Predicated region
    $region18: #{_lambda_.1} parent=1 // pred_check
      _
    $region19: #{_lambda_.1} parent=1 // pred_check_branch
      %24 = sbr.rel (0) target = $region21
    $region20: #{_lambda_.1} parent=1 // pred_region
      _
    $region21: #{_lambda_.1} parent=1 // pred_fallthru
      _
    // Predicated region
    $region22: #{_lambda_.1} parent=1 // pred_check
      _
    $region23: #{_lambda_.1} parent=1 // pred_check_branch
      %26 = sbr.rel (0) target = $region25
    $region24: #{_lambda_.1} parent=1 // pred_region
      _
    $region25: #{_lambda_.1} parent=1 // pred_fallthru
      _
    // Predicated region
    $region26: #{_lambda_.1} parent=1 // pred_check
      _
    $region27: #{_lambda_.1} parent=1 // pred_check_branch
      %28 = sbr.rel (0) target = $region29
    $region28: #{_lambda_.1} parent=1 // pred_region
      _
    $region29: #{_lambda_.1} parent=1 // pred_fallthru
      _
    // Predicated region
    $region30: #{_lambda_.1} parent=1 // pred_check
      _
    $region31: #{_lambda_.1} parent=1 // pred_check_branch
      %30 = sbr.rel (0) target = $region33
    $region32: #{_lambda_.1} parent=1 // pred_region
      _
    $region33: #{_lambda_.1} parent=1 // pred_fallthru
      _
    // Predicated region
    $region34: #{_lambda_.1} parent=1 // pred_check
      _
    $region35: #{_lambda_.1} parent=1 // pred_check_branch
      %32 = sbr.rel (0) target = $region37
    $region36: #{_lambda_.1} parent=1 // pred_region
      _
    $region37: #{_lambda_.1} parent=1 // pred_fallthru
      _
    %v33 = vld [vmem:[%s0] sm:$0xff]
    %v34 = vld [vmem:[%s0 + $0x8] sm:$0xff]
    %v35 = vld [vmem:[%s0 + $0x10] sm:$0xff]
    %v36 = vld [vmem:[%s0 + $0x18] sm:$0xff]
    %v37 = vld [vmem:[%s0 + $0x20] sm:$0xff]
    %v38 = vld [vmem:[%s0 + $0x28] sm:$0xff]
    %v39 = vld [vmem:[%s0 + $0x30] sm:$0xff]
    %v40 = vld [vmem:[%s0 + $0x38] sm:$0xff]
    %v41 = vld [vmem:[%s2] sm:$0x1]
    %v42 = vld [vmem:[%s2 + $0x1] sm:$0x1]
    %vm43 = vcmask 48128
    %v44 = vsel %vm43, %v33, 0.0
    %v45 = vsel %vm43, %v34, 0.0
    %v46 = vadd.f32 %v44, %v45
    %v47 = vsel %vm43, %v35, 0.0
    %v48 = vadd.f32 %v46, %v47
    %v49 = vsel %vm43, %v36, 0.0
    %v50 = vadd.f32 %v48, %v49
    %v51 = vsel %vm43, %v37, 0.0
    %v52 = vadd.f32 %v50, %v51
    %v53 = vsel %vm43, %v38, 0.0
    %v54 = vadd.f32 %v52, %v53
    %v55 = vsel %vm43, %v39, 0.0
    %v56 = vadd.f32 %v54, %v55
    %v57 = vsel %vm43, %v40, 0.0
    %v58 = vadd.f32 %v56, %v57
    %v59 = vrot.slane %v58, 4
    %v60 = vadd.f32 %v58, %v59
    %v61 = vrot.slane %v60, 2
    %v62 = vadd.f32 %v60, %v61
    %v63 = vrot.slane %v62, 1
    %v64 = vadd.f32 %v62, %v63
    %v65 = vrcp.pop 64.0
    %v66 = vmul.f32 %v64, %v65
    %v67 = vsub.f32 %v33, %v66
    %v68 = vsub.f32 %v34, %v66
    %v69 = vsub.f32 %v35, %v66
    %v70 = vsub.f32 %v36, %v66
    %v71 = vsub.f32 %v37, %v66
    %v72 = vsub.f32 %v38, %v66
    %v73 = vsub.f32 %v39, %v66
    %v74 = vsub.f32 %v40, %v66
    %v75 = vmul.f32 %v67, %v67
    %v76 = vmul.f32 %v68, %v68
    %v77 = vmul.f32 %v69, %v69
    %v78 = vmul.f32 %v70, %v70
    %v79 = vmul.f32 %v71, %v71
    %v80 = vmul.f32 %v72, %v72
    %v81 = vmul.f32 %v73, %v73
    %v82 = vmul.f32 %v74, %v74
    %v83 = vsel %vm43, %v75, 0.0
    %v84 = vsel %vm43, %v76, 0.0
    %v85 = vadd.f32 %v83, %v84
    %v86 = vsel %vm43, %v77, 0.0
    %v87 = vadd.f32 %v85, %v86
    %v88 = vsel %vm43, %v78, 0.0
    %v89 = vadd.f32 %v87, %v88
    %v90 = vsel %vm43, %v79, 0.0
    %v91 = vadd.f32 %v89, %v90
    %v92 = vsel %vm43, %v80, 0.0
    %v93 = vadd.f32 %v91, %v92
    %v94 = vsel %vm43, %v81, 0.0
    %v95 = vadd.f32 %v93, %v94
    %v96 = vsel %vm43, %v82, 0.0
    %v97 = vadd.f32 %v95, %v96
    %v98 = vrot.slane %v97, 4
    %v99 = vadd.f32 %v97, %v98
    %v100 = vrot.slane %v99, 2
    %v101 = vadd.f32 %v99, %v100
    %v102 = vrot.slane %v101, 1
    %v103 = vadd.f32 %v101, %v102
    %v104 = vmul.f32 %v103, %v65
    %v105 = vadd.f32 %v104, 1e-05
    %v106 = vrsqrt.pop %v105
    %v107 = vmul.f32 %v67, %v106
    %v108 = vmul.f32 %v68, %v106
    %v109 = vmul.f32 %v69, %v106
    %v110 = vmul.f32 %v70, %v106
    %v111 = vmul.f32 %v71, %v106
    %v112 = vmul.f32 %v72, %v106
    %v113 = vmul.f32 %v73, %v106
    %v114 = vmul.f32 %v74, %v106
    %v115 = vlaneseq
    %v116 = vshrl.u32 %v115, 7
    %v117 = vsub.s32 0, %v116
    %v118 = vrot.slane %v41, %v117
    %v119 = vmul.f32 %v107, %v118
    %v120 = vmul.f32 %v108, %v118
    %v121 = vmul.f32 %v109, %v118
    %v122 = vmul.f32 %v110, %v118
    %v123 = vmul.f32 %v111, %v118
    %v124 = vmul.f32 %v112, %v118
    %v125 = vmul.f32 %v113, %v118
    %v126 = vmul.f32 %v114, %v118
    %v127 = vlaneseq
    %v128 = vshrl.u32 %v127, 7
    %v129 = vsub.s32 0, %v128
    %v130 = vrot.slane %v42, %v129
    %v131 = vadd.f32 %v119, %v130
    %v132 = vadd.f32 %v120, %v130
    %v133 = vadd.f32 %v121, %v130
    %v134 = vadd.f32 %v122, %v130
    %v135 = vadd.f32 %v123, %v130
    %v136 = vadd.f32 %v124, %v130
    %v137 = vadd.f32 %v125, %v130
    %v138 = vadd.f32 %v126, %v130
    %v139 = vld [vmem:[%s3] sm:$0x3f]
    %v140 = vld [vmem:[%s2 + $0x2] sm:$0x1]
    %v141 = vlaneseq
    %v142 = vshrl.u32 %v141, 7
    %v143 = vsub.s32 0, %v142
    %v144 = vrot.slane %v140, %v143
    %v146 = vsel %vm43, %v131, 0
    %v149 = vsel %vm43, %v132, 0
    %v152 = vsel %vm43, %v133, 0
    %v155 = vsel %vm43, %v134, 0
    %v158 = vsel %vm43, %v135, 0
    %v161 = vsel %vm43, %v136, 0
    %v164 = vsel %vm43, %v137, 0
    %v167 = vsel %vm43, %v138, 0
    %vm169 = vcmask 1045504
    %v171 = vsel %vm169, %v139, 0
    %173 = vmatprep.subr.mxu0 0.0
    %174 = vmatpush1.msra.mxu0 0.0
    %175 = vmatprep.subr.mxu0 0.0
    %176 = vmatpush1.msra.mxu0 0.0
    %177 = vmatprep.subr.mxu0 0.0
    %178 = vmatpush1.msra.mxu0 0.0
    %179 = vmatprep.subr.mxu0 0.0
    %180 = vmatpush1.msra.mxu0 0.0
    %181 = vmatprep.subr.mxu0 0.0
    %182 = vmatpush1.msra.mxu0 0.0
    %183 = vmatprep.subr.mxu0 0.0
    %184 = vmatpush1.msra.mxu0 0.0
    %185 = vmatprep.subr.mxu0 0.0
    %186 = vmatpush1.msra.mxu0 0.0
    %187 = vmatprep.subr.mxu0 0.0
    %188 = vmatpush1.msra.mxu0 0.0
    %189 = vmatprep.subr.mxu0 0.0
    %190 = vmatpush1.msra.mxu0 0.0
    %191 = vmatprep.subr.mxu0 0.0
    %192 = vmatpush1.msra.mxu0 0.0
    %193 = vmatprep.subr.mxu0 0.0
    %194 = vmatpush1.msra.mxu0 0.0
    %195 = vmatprep.subr.mxu0 0.0
    %196 = vmatpush1.msra.mxu0 0.0
    %197 = vmatprep.subr.mxu0 0.0
    %198 = vmatpush1.msra.mxu0 0.0
    %199 = vmatprep.subr.mxu0 0.0
    %200 = vmatpush1.msra.mxu0 0.0
    %201 = vmatprep.subr.mxu0 0.0
    %202 = vmatpush1.msra.mxu0 0.0
    %203 = vmatprep.subr.mxu0 0.0
    %204 = vmatpush1.msra.mxu0 %v171
    %205 = vmatprep.subr.mxu0 0.0
    %206 = vmatpush2.msra.mxu0 0.0
    %207 = vmatprep.subr.mxu0 0.0
    %208 = vmatpush2.msra.mxu0 0.0
    %209 = vmatprep.subr.mxu0 0.0
    %210 = vmatpush2.msra.mxu0 0.0
    %211 = vmatprep.subr.mxu0 0.0
    %212 = vmatpush2.msra.mxu0 0.0
    %213 = vmatprep.subr.mxu0 0.0
    %214 = vmatpush2.msra.mxu0 0.0
    %215 = vmatprep.subr.mxu0 0.0
    %216 = vmatpush2.msra.mxu0 0.0
    %217 = vmatprep.subr.mxu0 0.0
    %218 = vmatpush2.msra.mxu0 0.0
    %219 = vmatprep.subr.mxu0 0.0
    %220 = vmatpush2.msra.mxu0 0.0
    %221 = vmatprep.subr.mxu0 0.0
    %222 = vmatpush2.msra.mxu0 0.0
    %223 = vmatprep.subr.mxu0 0.0
    %224 = vmatpush2.msra.mxu0 0.0
    %225 = vmatprep.subr.mxu0 0.0
    %226 = vmatpush2.msra.mxu0 0.0
    %227 = vmatprep.subr.mxu0 0.0
    %228 = vmatpush2.msra.mxu0 0.0
    %229 = vmatprep.subr.mxu0 0.0
    %230 = vmatpush2.msra.mxu0 0.0
    %231 = vmatprep.subr.mxu0 0.0
    %232 = vmatpush2.msra.mxu0 0.0
    %233 = vmatprep.subr.mxu0 0.0
    %234 = vmatpush2.msra.mxu0 0.0
    %235 = vmatprep.subr.mxu0 0.0
    %236 = vmatpush2.msra.mxu0 0.0
    %237 = vmatprep.mubr.f32.mxu0 0.0
    %238 = vmatmul.mubr.f32.gmra.mxu0 %v146
    %v239 = vpop.f32.mrf.mxu0
    %v240 = vadd.f32 %v144, %v239
    %v241 = vpop.f32.mrf.mxu0
    %242 = vmatprep.mubr.f32.mxu0 0.0
    %243 = vmatmul.mubr.f32.gmra.mxu0 %v149
    %v244 = vpop.f32.mrf.mxu0
    %v245 = vadd.f32 %v144, %v244
    %v246 = vpop.f32.mrf.mxu0
    %247 = vmatprep.mubr.f32.mxu0 0.0
    %248 = vmatmul.mubr.f32.gmra.mxu0 %v152
    %v249 = vpop.f32.mrf.mxu0
    %v250 = vadd.f32 %v144, %v249
    %v251 = vpop.f32.mrf.mxu0
    %252 = vmatprep.mubr.f32.mxu0 0.0
    %253 = vmatmul.mubr.f32.gmra.mxu0 %v155
    %v254 = vpop.f32.mrf.mxu0
    %v255 = vadd.f32 %v144, %v254
    %v256 = vpop.f32.mrf.mxu0
    %257 = vmatprep.mubr.f32.mxu0 0.0
    %258 = vmatmul.mubr.f32.gmra.mxu0 %v158
    %v259 = vpop.f32.mrf.mxu0
    %v260 = vadd.f32 %v144, %v259
    %v261 = vpop.f32.mrf.mxu0
    %262 = vmatprep.mubr.f32.mxu0 0.0
    %263 = vmatmul.mubr.f32.gmra.mxu0 %v161
    %v264 = vpop.f32.mrf.mxu0
    %v265 = vadd.f32 %v144, %v264
    %v266 = vpop.f32.mrf.mxu0
    %267 = vmatprep.mubr.f32.mxu0 0.0
    %268 = vmatmul.mubr.f32.gmra.mxu0 %v164
    %v269 = vpop.f32.mrf.mxu0
    %v270 = vadd.f32 %v144, %v269
    %v271 = vpop.f32.mrf.mxu0
    %272 = vmatprep.mubr.f32.mxu0 0.0
    %273 = vmatmul.mubr.f32.gmra.mxu0 %v167
    %v274 = vpop.f32.mrf.mxu0
    %v275 = vadd.f32 %v144, %v274
    %v276 = vpop.f32.mrf.mxu0
    %277 = vdwg.mxu0
    %v278 = vld [vmem:[%s2 + $0x3] sm:$0x1]
    %v279 = vld [vmem:[%s2 + $0x4] sm:$0x1]
    %vm280 = vcmask 130048
    %v281 = vsel %vm280, %v240, 0.0
    %v282 = vsel %vm280, %v245, 0.0
    %v283 = vadd.f32 %v281, %v282
    %v284 = vsel %vm280, %v250, 0.0
    %v285 = vadd.f32 %v283, %v284
    %v286 = vsel %vm280, %v255, 0.0
    %v287 = vadd.f32 %v285, %v286
    %v288 = vsel %vm280, %v260, 0.0
    %v289 = vadd.f32 %v287, %v288
    %v290 = vsel %vm280, %v265, 0.0
    %v291 = vadd.f32 %v289, %v290
    %v292 = vsel %vm280, %v270, 0.0
    %v293 = vadd.f32 %v291, %v292
    %v294 = vsel %vm280, %v275, 0.0
    %v295 = vadd.f32 %v293, %v294
    %v296 = vrot.slane %v295, 4
    %v297 = vadd.f32 %v295, %v296
    %v298 = vrot.slane %v297, 2
    %v299 = vadd.f32 %v297, %v298
    %v300 = vrot.slane %v299, 1
    %v301 = vadd.f32 %v299, %v300
    %v302 = vmul.f32 %v301, %v65
    %v303 = vsub.f32 %v240, %v302
    %v304 = vsub.f32 %v245, %v302
    %v305 = vsub.f32 %v250, %v302
    %v306 = vsub.f32 %v255, %v302
    %v307 = vsub.f32 %v260, %v302
    %v308 = vsub.f32 %v265, %v302
    %v309 = vsub.f32 %v270, %v302
    %v310 = vsub.f32 %v275, %v302
    %v311 = vmul.f32 %v303, %v303
    %v312 = vmul.f32 %v304, %v304
    %v313 = vmul.f32 %v305, %v305
    %v314 = vmul.f32 %v306, %v306
    %v315 = vmul.f32 %v307, %v307
    %v316 = vmul.f32 %v308, %v308
    %v317 = vmul.f32 %v309, %v309
    %v318 = vmul.f32 %v310, %v310
    %v319 = vsel %vm280, %v311, 0.0
    %v320 = vsel %vm280, %v312, 0.0
    %v321 = vadd.f32 %v319, %v320
    %v322 = vsel %vm280, %v313, 0.0
    %v323 = vadd.f32 %v321, %v322
    %v324 = vsel %vm280, %v314, 0.0
    %v325 = vadd.f32 %v323, %v324
    %v326 = vsel %vm280, %v315, 0.0
    %v327 = vadd.f32 %v325, %v326
    %v328 = vsel %vm280, %v316, 0.0
    %v329 = vadd.f32 %v327, %v328
    %v330 = vsel %vm280, %v317, 0.0
    %v331 = vadd.f32 %v329, %v330
    %v332 = vsel %vm280, %v318, 0.0
    %v333 = vadd.f32 %v331, %v332
    %v334 = vrot.slane %v333, 4
    %v335 = vadd.f32 %v333, %v334
    %v336 = vrot.slane %v335, 2
    %v337 = vadd.f32 %v335, %v336
    %v338 = vrot.slane %v337, 1
    %v339 = vadd.f32 %v337, %v338
    %v340 = vmul.f32 %v339, %v65
    %v341 = vadd.f32 %v340, 1e-05
    %v342 = vrsqrt.pop %v341
    %v343 = vmul.f32 %v303, %v342
    %v344 = vmul.f32 %v304, %v342
    %v345 = vmul.f32 %v305, %v342
    %v346 = vmul.f32 %v306, %v342
    %v347 = vmul.f32 %v307, %v342
    %v348 = vmul.f32 %v308, %v342
    %v349 = vmul.f32 %v309, %v342
    %v350 = vmul.f32 %v310, %v342
    %v351 = vlaneseq
    %v352 = vshrl.u32 %v351, 7
    %v353 = vsub.s32 0, %v352
    %v354 = vrot.slane %v278, %v353
    %v355 = vmul.f32 %v343, %v354
    %v356 = vmul.f32 %v344, %v354
    %v357 = vmul.f32 %v345, %v354
    %v358 = vmul.f32 %v346, %v354
    %v359 = vmul.f32 %v347, %v354
    %v360 = vmul.f32 %v348, %v354
    %v361 = vmul.f32 %v349, %v354
    %v362 = vmul.f32 %v350, %v354
    %v363 = vlaneseq
    %v364 = vshrl.u32 %v363, 7
    %v365 = vsub.s32 0, %v364
    %v366 = vrot.slane %v279, %v365
    %v367 = vadd.f32 %v355, %v366
    %v368 = vadd.f32 %v356, %v366
    %v369 = vadd.f32 %v357, %v366
    %v370 = vadd.f32 %v358, %v366
    %v371 = vadd.f32 %v359, %v366
    %v372 = vadd.f32 %v360, %v366
    %v373 = vadd.f32 %v361, %v366
    %v374 = vadd.f32 %v362, %v366
    %v375 = vmax.f32 %v367, 0.0
    %v376 = vmax.f32 %v368, 0.0
    %v377 = vmax.f32 %v369, 0.0
    %v378 = vmax.f32 %v370, 0.0
    %v379 = vmax.f32 %v371, 0.0
    %v380 = vmax.f32 %v372, 0.0
    %v381 = vmax.f32 %v373, 0.0
    %v382 = vmax.f32 %v374, 0.0
    %v383 = vlaneseq
    %v384 = vshrl.u32 %v383, 7
    %v385 = vlaneseq
    %v386 = vand.u32 %v385, 127
    %v387 = vmul.u32 %v384, 8
    %vm388 = vcmp.ge.s32.totalorder %v386, %v387
    %v389 = vadd.s32 %v384, 1
    %v390 = vmul.u32 %v389, 8
    %vm391 = vcmp.lt.s32.totalorder %v386, %v390
    %vm392 = vmand %vm388, %vm391
    %v393 = vsel %vm392, 0.125, 0.0
    %vm394 = vcmask 523264
    %v396 = vsel %vm394, %v393, 0
    %398 = vmatprep.subr.mxu0 0.0
    %399 = vmatpush1.msra.mxu0 0.0
    %400 = vmatprep.subr.mxu0 0.0
    %401 = vmatpush1.msra.mxu0 0.0
    %402 = vmatprep.subr.mxu0 0.0
    %403 = vmatpush1.msra.mxu0 0.0
    %404 = vmatprep.subr.mxu0 0.0
    %405 = vmatpush1.msra.mxu0 0.0
    %406 = vmatprep.subr.mxu0 0.0
    %407 = vmatpush1.msra.mxu0 0.0
    %408 = vmatprep.subr.mxu0 0.0
    %409 = vmatpush1.msra.mxu0 0.0
    %410 = vmatprep.subr.mxu0 0.0
    %411 = vmatpush1.msra.mxu0 0.0
    %412 = vmatprep.subr.mxu0 0.0
    %413 = vmatpush1.msra.mxu0 0.0
    %414 = vmatprep.subr.mxu0 0.0
    %415 = vmatpush1.msra.mxu0 %v382
    %416 = vmatprep.subr.mxu0 0.0
    %417 = vmatpush1.msra.mxu0 %v381
    %418 = vmatprep.subr.mxu0 0.0
    %419 = vmatpush1.msra.mxu0 %v380
    %420 = vmatprep.subr.mxu0 0.0
    %421 = vmatpush1.msra.mxu0 %v379
    %422 = vmatprep.subr.mxu0 0.0
    %423 = vmatpush1.msra.mxu0 %v378
    %424 = vmatprep.subr.mxu0 0.0
    %425 = vmatpush1.msra.mxu0 %v377
    %426 = vmatprep.subr.mxu0 0.0
    %427 = vmatpush1.msra.mxu0 %v376
    %428 = vmatprep.subr.mxu0 0.0
    %429 = vmatpush1.msra.mxu0 %v375
    %430 = vmatprep.subr.mxu0 0.0
    %431 = vmatpush2.msra.mxu0 0.0
    %432 = vmatprep.subr.mxu0 0.0
    %433 = vmatpush2.msra.mxu0 0.0
    %434 = vmatprep.subr.mxu0 0.0
    %435 = vmatpush2.msra.mxu0 0.0
    %436 = vmatprep.subr.mxu0 0.0
    %437 = vmatpush2.msra.mxu0 0.0
    %438 = vmatprep.subr.mxu0 0.0
    %439 = vmatpush2.msra.mxu0 0.0
    %440 = vmatprep.subr.mxu0 0.0
    %441 = vmatpush2.msra.mxu0 0.0
    %442 = vmatprep.subr.mxu0 0.0
    %443 = vmatpush2.msra.mxu0 0.0
    %444 = vmatprep.subr.mxu0 0.0
    %445 = vmatpush2.msra.mxu0 0.0
    %446 = vmatprep.subr.mxu0 0.0
    %447 = vmatpush2.msra.mxu0 0.0
    %448 = vmatprep.subr.mxu0 0.0
    %449 = vmatpush2.msra.mxu0 0.0
    %450 = vmatprep.subr.mxu0 0.0
    %451 = vmatpush2.msra.mxu0 0.0
    %452 = vmatprep.subr.mxu0 0.0
    %453 = vmatpush2.msra.mxu0 0.0
    %454 = vmatprep.subr.mxu0 0.0
    %455 = vmatpush2.msra.mxu0 0.0
    %456 = vmatprep.subr.mxu0 0.0
    %457 = vmatpush2.msra.mxu0 0.0
    %458 = vmatprep.subr.mxu0 0.0
    %459 = vmatpush2.msra.mxu0 0.0
    %460 = vmatprep.subr.mxu0 0.0
    %461 = vmatpush2.msra.mxu0 0.0
    %462 = vmatprep.mubr.f32.mxu0 0.0
    %463 = vmatmul.mubr.f32.gmra.mxu0 %v396
    %v464 = vpop.f32.mrf.mxu0
    %v465 = vadd.f32 0.0, %v464
    %v466 = vpop.f32.mrf.mxu0
    %467 = vdwg.mxu0
    %v468 = vld [vmem:[%s5] sm:$0xff]
    %v469 = vld [vmem:[%s5 + $0x8] sm:$0xff]
    %v470 = vld [vmem:[%s2 + $0xa] sm:$0x1]
    %v471 = vlaneseq
    %v472 = vshrl.u32 %v471, 7
    %v473 = vsub.s32 0, %v472
    %v474 = vrot.slane %v470, %v473
    %v476 = vsel %vm280, %v465, 0
    %478 = vmatprep.subr.mxu0 0.0
    %479 = vmatpush1.msra.mxu0 0.0
    %480 = vmatprep.subr.mxu0 0.0
    %481 = vmatpush1.msra.mxu0 0.0
    %482 = vmatprep.subr.mxu0 0.0
    %483 = vmatpush1.msra.mxu0 0.0
    %484 = vmatprep.subr.mxu0 0.0
    %485 = vmatpush1.msra.mxu0 0.0
    %486 = vmatprep.subr.mxu0 0.0
    %487 = vmatpush1.msra.mxu0 0.0
    %488 = vmatprep.subr.mxu0 0.0
    %489 = vmatpush1.msra.mxu0 0.0
    %490 = vmatprep.subr.mxu0 0.0
    %491 = vmatpush1.msra.mxu0 0.0
    %492 = vmatprep.subr.mxu0 0.0
    %493 = vmatpush1.msra.mxu0 0.0
    %494 = vmatprep.subr.mxu0 0.0
    %495 = vmatpush1.msra.mxu0 0.0
    %496 = vmatprep.subr.mxu0 0.0
    %497 = vmatpush1.msra.mxu0 0.0
    %498 = vmatprep.subr.mxu0 0.0
    %499 = vmatpush1.msra.mxu0 0.0
    %500 = vmatprep.subr.mxu0 0.0
    %501 = vmatpush1.msra.mxu0 0.0
    %502 = vmatprep.subr.mxu0 0.0
    %503 = vmatpush1.msra.mxu0 0.0
    %504 = vmatprep.subr.mxu0 0.0
    %505 = vmatpush1.msra.mxu0 0.0
    %506 = vmatprep.subr.mxu0 0.0
    %507 = vmatpush1.msra.mxu0 %v469
    %508 = vmatprep.subr.mxu0 0.0
    %509 = vmatpush1.msra.mxu0 %v468
    %510 = vmatprep.subr.mxu0 0.0
    %511 = vmatpush2.msra.mxu0 0.0
    %512 = vmatprep.subr.mxu0 0.0
    %513 = vmatpush2.msra.mxu0 0.0
    %514 = vmatprep.subr.mxu0 0.0
    %515 = vmatpush2.msra.mxu0 0.0
    %516 = vmatprep.subr.mxu0 0.0
    %517 = vmatpush2.msra.mxu0 0.0
    %518 = vmatprep.subr.mxu0 0.0
    %519 = vmatpush2.msra.mxu0 0.0
    %520 = vmatprep.subr.mxu0 0.0
    %521 = vmatpush2.msra.mxu0 0.0
    %522 = vmatprep.subr.mxu0 0.0
    %523 = vmatpush2.msra.mxu0 0.0
    %524 = vmatprep.subr.mxu0 0.0
    %525 = vmatpush2.msra.mxu0 0.0
    %526 = vmatprep.subr.mxu0 0.0
    %527 = vmatpush2.msra.mxu0 0.0
    %528 = vmatprep.subr.mxu0 0.0
    %529 = vmatpush2.msra.mxu0 0.0
    %530 = vmatprep.subr.mxu0 0.0
    %531 = vmatpush2.msra.mxu0 0.0
    %532 = vmatprep.subr.mxu0 0.0
    %533 = vmatpush2.msra.mxu0 0.0
    %534 = vmatprep.subr.mxu0 0.0
    %535 = vmatpush2.msra.mxu0 0.0
    %536 = vmatprep.subr.mxu0 0.0
    %537 = vmatpush2.msra.mxu0 0.0
    %538 = vmatprep.subr.mxu0 0.0
    %539 = vmatpush2.msra.mxu0 0.0
    %540 = vmatprep.subr.mxu0 0.0
    %541 = vmatpush2.msra.mxu0 0.0
    %542 = vmatprep.mubr.f32.mxu0 0.0
    %543 = vmatmul.mubr.f32.gmra.mxu0 %v476
    %v544 = vpop.f32.mrf.mxu0
    %v545 = vadd.f32 %v474, %v544
    %v546 = vpop.f32.mrf.mxu0
    %547 = vdwg.mxu0
    %v548 = vmax.f32 %v545, 0.0
    %v549 = vld [vmem:[%s7] sm:$0xff]
    %v550 = vld [vmem:[%s7 + $0x8] sm:$0xff]
    %v551 = vld [vmem:[%s7 + $0x10] sm:$0xff]
    %v552 = vld [vmem:[%s7 + $0x18] sm:$0xff]
    %v553 = vld [vmem:[%s2 + $0xc] sm:$0x1]
    %v554 = vlaneseq
    %v555 = vshrl.u32 %v554, 7
    %v556 = vsub.s32 0, %v555
    %v557 = vrot.slane %v553, %v556
    %vm558 = vcmask 261120
    %v560 = vsel %vm558, %v548, 0
    %562 = vmatprep.subr.mxu0 0.0
    %563 = vmatpush1.msra.mxu0 0.0
    %564 = vmatprep.subr.mxu0 0.0
    %565 = vmatpush1.msra.mxu0 0.0
    %566 = vmatprep.subr.mxu0 0.0
    %567 = vmatpush1.msra.mxu0 0.0
    %568 = vmatprep.subr.mxu0 0.0
    %569 = vmatpush1.msra.mxu0 0.0
    %570 = vmatprep.subr.mxu0 0.0
    %571 = vmatpush1.msra.mxu0 0.0
    %572 = vmatprep.subr.mxu0 0.0
    %573 = vmatpush1.msra.mxu0 0.0
    %574 = vmatprep.subr.mxu0 0.0
    %575 = vmatpush1.msra.mxu0 0.0
    %576 = vmatprep.subr.mxu0 0.0
    %577 = vmatpush1.msra.mxu0 0.0
    %578 = vmatprep.subr.mxu0 0.0
    %579 = vmatpush1.msra.mxu0 0.0
    %580 = vmatprep.subr.mxu0 0.0
    %581 = vmatpush1.msra.mxu0 0.0
    %582 = vmatprep.subr.mxu0 0.0
    %583 = vmatpush1.msra.mxu0 0.0
    %584 = vmatprep.subr.mxu0 0.0
    %585 = vmatpush1.msra.mxu0 0.0
    %586 = vmatprep.subr.mxu0 0.0
    %587 = vmatpush1.msra.mxu0 %v552
    %588 = vmatprep.subr.mxu0 0.0
    %589 = vmatpush1.msra.mxu0 %v551
    %590 = vmatprep.subr.mxu0 0.0
    %591 = vmatpush1.msra.mxu0 %v550
    %592 = vmatprep.subr.mxu0 0.0
    %593 = vmatpush1.msra.mxu0 %v549
    %594 = vmatprep.subr.mxu0 0.0
    %595 = vmatpush2.msra.mxu0 0.0
    %596 = vmatprep.subr.mxu0 0.0
    %597 = vmatpush2.msra.mxu0 0.0
    %598 = vmatprep.subr.mxu0 0.0
    %599 = vmatpush2.msra.mxu0 0.0
    %600 = vmatprep.subr.mxu0 0.0
    %601 = vmatpush2.msra.mxu0 0.0
    %602 = vmatprep.subr.mxu0 0.0
    %603 = vmatpush2.msra.mxu0 0.0
    %604 = vmatprep.subr.mxu0 0.0
    %605 = vmatpush2.msra.mxu0 0.0
    %606 = vmatprep.subr.mxu0 0.0
    %607 = vmatpush2.msra.mxu0 0.0
    %608 = vmatprep.subr.mxu0 0.0
    %609 = vmatpush2.msra.mxu0 0.0
    %610 = vmatprep.subr.mxu0 0.0
    %611 = vmatpush2.msra.mxu0 0.0
    %612 = vmatprep.subr.mxu0 0.0
    %613 = vmatpush2.msra.mxu0 0.0
    %614 = vmatprep.subr.mxu0 0.0
    %615 = vmatpush2.msra.mxu0 0.0
    %616 = vmatprep.subr.mxu0 0.0
    %617 = vmatpush2.msra.mxu0 0.0
    %618 = vmatprep.subr.mxu0 0.0
    %619 = vmatpush2.msra.mxu0 0.0
    %620 = vmatprep.subr.mxu0 0.0
    %621 = vmatpush2.msra.mxu0 0.0
    %622 = vmatprep.subr.mxu0 0.0
    %623 = vmatpush2.msra.mxu0 0.0
    %624 = vmatprep.subr.mxu0 0.0
    %625 = vmatpush2.msra.mxu0 0.0
    %626 = vmatprep.mubr.f32.mxu0 0.0
    %627 = vmatmul.mubr.f32.gmra.mxu0 %v560
    %v628 = vpop.f32.mrf.mxu0
    %v629 = vadd.f32 %v557, %v628
    %v630 = vpop.f32.mrf.mxu0
    %631 = vdwg.mxu0
    %v632 = vld [vmem:[%s2 + $0xd] sm:$0x1]
    %v633 = vld [vmem:[%s2 + $0xe] sm:$0x1]
    %v634 = vsel %vm558, %v629, 0.0
    %v635 = vrot.slane %v634, 4
    %v636 = vadd.f32 %v634, %v635
    %v637 = vrot.slane %v636, 2
    %v638 = vadd.f32 %v636, %v637
    %v639 = vrot.slane %v638, 1
    %v640 = vadd.f32 %v638, %v639
    %v641 = vrcp.pop 8.0
    %v642 = vmul.f32 %v640, %v641
    %v643 = vsub.f32 %v629, %v642
    %v644 = vmul.f32 %v643, %v643
    %v645 = vsel %vm558, %v644, 0.0
    %v646 = vrot.slane %v645, 4
    %v647 = vadd.f32 %v645, %v646
    %v648 = vrot.slane %v647, 2
    %v649 = vadd.f32 %v647, %v648
    %v650 = vrot.slane %v649, 1
    %v651 = vadd.f32 %v649, %v650
    %v652 = vmul.f32 %v651, %v641
    %v653 = vadd.f32 %v652, 1e-05
    %v654 = vrsqrt.pop %v653
    %v655 = vmul.f32 %v643, %v654
    %v656 = vlaneseq
    %v657 = vshrl.u32 %v656, 7
    %v658 = vsub.s32 0, %v657
    %v659 = vrot.slane %v632, %v658
    %v660 = vmul.f32 %v655, %v659
    %v661 = vlaneseq
    %v662 = vshrl.u32 %v661, 7
    %v663 = vsub.s32 0, %v662
    %v664 = vrot.slane %v633, %v663
    %v665 = vadd.f32 %v660, %v664
    %v666 = vmax.f32 %v665, 0.0
    %v667 = vld [vmem:[%s8] sm:$0xff]
    %v668 = vld [vmem:[%s8 + $0x8] sm:$0xff]
    %v669 = vld [vmem:[%s8 + $0x10] sm:$0xff]
    %v670 = vld [vmem:[%s8 + $0x18] sm:$0xff]
    %v672 = vsel %vm558, %v666, 0
    %674 = vmatprep.subr.mxu0 0.0
    %675 = vmatpush1.msra.mxu0 0.0
    %676 = vmatprep.subr.mxu0 0.0
    %677 = vmatpush1.msra.mxu0 0.0
    %678 = vmatprep.subr.mxu0 0.0
    %679 = vmatpush1.msra.mxu0 0.0
    %680 = vmatprep.subr.mxu0 0.0
    %681 = vmatpush1.msra.mxu0 0.0
    %682 = vmatprep.subr.mxu0 0.0
    %683 = vmatpush1.msra.mxu0 0.0
    %684 = vmatprep.subr.mxu0 0.0
    %685 = vmatpush1.msra.mxu0 0.0
    %686 = vmatprep.subr.mxu0 0.0
    %687 = vmatpush1.msra.mxu0 0.0
    %688 = vmatprep.subr.mxu0 0.0
    %689 = vmatpush1.msra.mxu0 0.0
    %690 = vmatprep.subr.mxu0 0.0
    %691 = vmatpush1.msra.mxu0 0.0
    %692 = vmatprep.subr.mxu0 0.0
    %693 = vmatpush1.msra.mxu0 0.0
    %694 = vmatprep.subr.mxu0 0.0
    %695 = vmatpush1.msra.mxu0 0.0
    %696 = vmatprep.subr.mxu0 0.0
    %697 = vmatpush1.msra.mxu0 0.0
    %698 = vmatprep.subr.mxu0 0.0
    %699 = vmatpush1.msra.mxu0 %v670
    %700 = vmatprep.subr.mxu0 0.0
    %701 = vmatpush1.msra.mxu0 %v669
    %702 = vmatprep.subr.mxu0 0.0
    %703 = vmatpush1.msra.mxu0 %v668
    %704 = vmatprep.subr.mxu0 0.0
    %705 = vmatpush1.msra.mxu0 %v667
    %706 = vmatprep.subr.mxu0 0.0
    %707 = vmatpush2.msra.mxu0 0.0
    %708 = vmatprep.subr.mxu0 0.0
    %709 = vmatpush2.msra.mxu0 0.0
    %710 = vmatprep.subr.mxu0 0.0
    %711 = vmatpush2.msra.mxu0 0.0
    %712 = vmatprep.subr.mxu0 0.0
    %713 = vmatpush2.msra.mxu0 0.0
    %714 = vmatprep.subr.mxu0 0.0
    %715 = vmatpush2.msra.mxu0 0.0
    %716 = vmatprep.subr.mxu0 0.0
    %717 = vmatpush2.msra.mxu0 0.0
    %718 = vmatprep.subr.mxu0 0.0
    %719 = vmatpush2.msra.mxu0 0.0
    %720 = vmatprep.subr.mxu0 0.0
    %721 = vmatpush2.msra.mxu0 0.0
    %722 = vmatprep.subr.mxu0 0.0
    %723 = vmatpush2.msra.mxu0 0.0
    %724 = vmatprep.subr.mxu0 0.0
    %725 = vmatpush2.msra.mxu0 0.0
    %726 = vmatprep.subr.mxu0 0.0
    %727 = vmatpush2.msra.mxu0 0.0
    %728 = vmatprep.subr.mxu0 0.0
    %729 = vmatpush2.msra.mxu0 0.0
    %730 = vmatprep.subr.mxu0 0.0
    %731 = vmatpush2.msra.mxu0 0.0
    %732 = vmatprep.subr.mxu0 0.0
    %733 = vmatpush2.msra.mxu0 0.0
    %734 = vmatprep.subr.mxu0 0.0
    %735 = vmatpush2.msra.mxu0 0.0
    %736 = vmatprep.subr.mxu0 0.0
    %737 = vmatpush2.msra.mxu0 0.0
    %738 = vmatprep.mubr.f32.mxu0 0.0
    %739 = vmatmul.mubr.f32.gmra.mxu0 %v672
    %v740 = vpop.f32.mrf.mxu0
    %v741 = vadd.f32 0.0, %v740
    %v742 = vpop.f32.mrf.mxu0
    %743 = vdwg.mxu0
    %v744 = vld [vmem:[%s1] sm:$0xff]
    %v745 = vld [vmem:[%s1 + $0x8] sm:$0xff]
    %v746 = vld [vmem:[%s1 + $0x10] sm:$0xff]
    %v747 = vld [vmem:[%s1 + $0x18] sm:$0xff]
    %v748 = vld [vmem:[%s1 + $0x20] sm:$0xff]
    %v749 = vld [vmem:[%s1 + $0x28] sm:$0xff]
    %v750 = vld [vmem:[%s1 + $0x30] sm:$0xff]
    %v751 = vld [vmem:[%s1 + $0x38] sm:$0xff]
    %v752 = vld [vmem:[%s1 + $0x40] sm:$0xff]
    %v753 = vld [vmem:[%s1 + $0x48] sm:$0xff]
    %v754 = vld [vmem:[%s2 + $0x5] sm:$0x1]
    %v755 = vld [vmem:[%s2 + $0x6] sm:$0x1]
    %vm756 = vcmask 39936
    %v757 = vsel %vm756, %v744, 0.0
    %v758 = vsel %vm756, %v745, 0.0
    %v759 = vadd.f32 %v757, %v758
    %v760 = vsel %vm756, %v746, 0.0
    %v761 = vadd.f32 %v759, %v760
    %v762 = vsel %vm756, %v747, 0.0
    %v763 = vadd.f32 %v761, %v762
    %v764 = vsel %vm756, %v748, 0.0
    %v765 = vadd.f32 %v763, %v764
    %v766 = vsel %vm756, %v749, 0.0
    %v767 = vadd.f32 %v765, %v766
    %v768 = vsel %vm756, %v750, 0.0
    %v769 = vadd.f32 %v767, %v768
    %v770 = vsel %vm756, %v751, 0.0
    %v771 = vadd.f32 %v769, %v770
    %v772 = vsel %vm756, %v752, 0.0
    %v773 = vadd.f32 %v771, %v772
    %v774 = vsel %vm756, %v753, 0.0
    %v775 = vadd.f32 %v773, %v774
    %v776 = vrot.slane %v775, 4
    %v777 = vadd.f32 %v775, %v776
    %v778 = vrot.slane %v777, 2
    %v779 = vadd.f32 %v777, %v778
    %v780 = vrot.slane %v779, 1
    %v781 = vadd.f32 %v779, %v780
    %v782 = vrcp.pop 80.0
    %v783 = vmul.f32 %v781, %v782
    %v784 = vsub.f32 %v744, %v783
    %v785 = vsub.f32 %v745, %v783
    %v786 = vsub.f32 %v746, %v783
    %v787 = vsub.f32 %v747, %v783
    %v788 = vsub.f32 %v748, %v783
    %v789 = vsub.f32 %v749, %v783
    %v790 = vsub.f32 %v750, %v783
    %v791 = vsub.f32 %v751, %v783
    %v792 = vsub.f32 %v752, %v783
    %v793 = vsub.f32 %v753, %v783
    %v794 = vmul.f32 %v784, %v784
    %v795 = vmul.f32 %v785, %v785
    %v796 = vmul.f32 %v786, %v786
    %v797 = vmul.f32 %v787, %v787
    %v798 = vmul.f32 %v788, %v788
    %v799 = vmul.f32 %v789, %v789
    %v800 = vmul.f32 %v790, %v790
    %v801 = vmul.f32 %v791, %v791
    %v802 = vmul.f32 %v792, %v792
    %v803 = vmul.f32 %v793, %v793
    %v804 = vsel %vm756, %v794, 0.0
    %v805 = vsel %vm756, %v795, 0.0
    %v806 = vadd.f32 %v804, %v805
    %v807 = vsel %vm756, %v796, 0.0
    %v808 = vadd.f32 %v806, %v807
    %v809 = vsel %vm756, %v797, 0.0
    %v810 = vadd.f32 %v808, %v809
    %v811 = vsel %vm756, %v798, 0.0
    %v812 = vadd.f32 %v810, %v811
    %v813 = vsel %vm756, %v799, 0.0
    %v814 = vadd.f32 %v812, %v813
    %v815 = vsel %vm756, %v800, 0.0
    %v816 = vadd.f32 %v814, %v815
    %v817 = vsel %vm756, %v801, 0.0
    %v818 = vadd.f32 %v816, %v817
    %v819 = vsel %vm756, %v802, 0.0
    %v820 = vadd.f32 %v818, %v819
    %v821 = vsel %vm756, %v803, 0.0
    %v822 = vadd.f32 %v820, %v821
    %v823 = vrot.slane %v822, 4
    %v824 = vadd.f32 %v822, %v823
    %v825 = vrot.slane %v824, 2
    %v826 = vadd.f32 %v824, %v825
    %v827 = vrot.slane %v826, 1
    %v828 = vadd.f32 %v826, %v827
    %v829 = vmul.f32 %v828, %v782
    %v830 = vadd.f32 %v829, 1e-05
    %v831 = vrsqrt.pop %v830
    %v832 = vmul.f32 %v784, %v831
    %v833 = vmul.f32 %v785, %v831
    %v834 = vmul.f32 %v786, %v831
    %v835 = vmul.f32 %v787, %v831
    %v836 = vmul.f32 %v788, %v831
    %v837 = vmul.f32 %v789, %v831
    %v838 = vmul.f32 %v790, %v831
    %v839 = vmul.f32 %v791, %v831
    %v840 = vmul.f32 %v792, %v831
    %v841 = vmul.f32 %v793, %v831
    %v842 = vlaneseq
    %v843 = vshrl.u32 %v842, 7
    %v844 = vsub.s32 0, %v843
    %v845 = vrot.slane %v754, %v844
    %v846 = vmul.f32 %v832, %v845
    %v847 = vmul.f32 %v833, %v845
    %v848 = vmul.f32 %v834, %v845
    %v849 = vmul.f32 %v835, %v845
    %v850 = vmul.f32 %v836, %v845
    %v851 = vmul.f32 %v837, %v845
    %v852 = vmul.f32 %v838, %v845
    %v853 = vmul.f32 %v839, %v845
    %v854 = vmul.f32 %v840, %v845
    %v855 = vmul.f32 %v841, %v845
    %v856 = vlaneseq
    %v857 = vshrl.u32 %v856, 7
    %v858 = vsub.s32 0, %v857
    %v859 = vrot.slane %v755, %v858
    %v860 = vadd.f32 %v846, %v859
    %v861 = vadd.f32 %v847, %v859
    %v862 = vadd.f32 %v848, %v859
    %v863 = vadd.f32 %v849, %v859
    %v864 = vadd.f32 %v850, %v859
    %v865 = vadd.f32 %v851, %v859
    %v866 = vadd.f32 %v852, %v859
    %v867 = vadd.f32 %v853, %v859
    %v868 = vadd.f32 %v854, %v859
    %v869 = vadd.f32 %v855, %v859
    %v870 = vld [vmem:[%s4] sm:$0x1f]
    %v871 = vld [vmem:[%s2 + $0x7] sm:$0x1]
    %v872 = vlaneseq
    %v873 = vshrl.u32 %v872, 7
    %v874 = vsub.s32 0, %v873
    %v875 = vrot.slane %v871, %v874
    %v877 = vsel %vm756, %v860, 0
    %v880 = vsel %vm756, %v861, 0
    %v883 = vsel %vm756, %v862, 0
    %v886 = vsel %vm756, %v863, 0
    %v889 = vsel %vm756, %v864, 0
    %v892 = vsel %vm756, %v865, 0
    %v895 = vsel %vm756, %v866, 0
    %v898 = vsel %vm756, %v867, 0
    %v901 = vsel %vm756, %v868, 0
    %v904 = vsel %vm756, %v869, 0
    %vm906 = vcmask 1044480
    %v908 = vsel %vm906, %v870, 0
    %910 = vmatprep.subr.mxu0 0.0
    %911 = vmatpush1.msra.mxu0 0.0
    %912 = vmatprep.subr.mxu0 0.0
    %913 = vmatpush1.msra.mxu0 0.0
    %914 = vmatprep.subr.mxu0 0.0
    %915 = vmatpush1.msra.mxu0 0.0
    %916 = vmatprep.subr.mxu0 0.0
    %917 = vmatpush1.msra.mxu0 0.0
    %918 = vmatprep.subr.mxu0 0.0
    %919 = vmatpush1.msra.mxu0 0.0
    %920 = vmatprep.subr.mxu0 0.0
    %921 = vmatpush1.msra.mxu0 0.0
    %922 = vmatprep.subr.mxu0 0.0
    %923 = vmatpush1.msra.mxu0 0.0
    %924 = vmatprep.subr.mxu0 0.0
    %925 = vmatpush1.msra.mxu0 0.0
    %926 = vmatprep.subr.mxu0 0.0
    %927 = vmatpush1.msra.mxu0 0.0
    %928 = vmatprep.subr.mxu0 0.0
    %929 = vmatpush1.msra.mxu0 0.0
    %930 = vmatprep.subr.mxu0 0.0
    %931 = vmatpush1.msra.mxu0 0.0
    %932 = vmatprep.subr.mxu0 0.0
    %933 = vmatpush1.msra.mxu0 0.0
    %934 = vmatprep.subr.mxu0 0.0
    %935 = vmatpush1.msra.mxu0 0.0
    %936 = vmatprep.subr.mxu0 0.0
    %937 = vmatpush1.msra.mxu0 0.0
    %938 = vmatprep.subr.mxu0 0.0
    %939 = vmatpush1.msra.mxu0 0.0
    %940 = vmatprep.subr.mxu0 0.0
    %941 = vmatpush1.msra.mxu0 %v908
    %942 = vmatprep.subr.mxu0 0.0
    %943 = vmatpush2.msra.mxu0 0.0
    %944 = vmatprep.subr.mxu0 0.0
    %945 = vmatpush2.msra.mxu0 0.0
    %946 = vmatprep.subr.mxu0 0.0
    %947 = vmatpush2.msra.mxu0 0.0
    %948 = vmatprep.subr.mxu0 0.0
    %949 = vmatpush2.msra.mxu0 0.0
    %950 = vmatprep.subr.mxu0 0.0
    %951 = vmatpush2.msra.mxu0 0.0
    %952 = vmatprep.subr.mxu0 0.0
    %953 = vmatpush2.msra.mxu0 0.0
    %954 = vmatprep.subr.mxu0 0.0
    %955 = vmatpush2.msra.mxu0 0.0
    %956 = vmatprep.subr.mxu0 0.0
    %957 = vmatpush2.msra.mxu0 0.0
    %958 = vmatprep.subr.mxu0 0.0
    %959 = vmatpush2.msra.mxu0 0.0
    %960 = vmatprep.subr.mxu0 0.0
    %961 = vmatpush2.msra.mxu0 0.0
    %962 = vmatprep.subr.mxu0 0.0
    %963 = vmatpush2.msra.mxu0 0.0
    %964 = vmatprep.subr.mxu0 0.0
    %965 = vmatpush2.msra.mxu0 0.0
    %966 = vmatprep.subr.mxu0 0.0
    %967 = vmatpush2.msra.mxu0 0.0
    %968 = vmatprep.subr.mxu0 0.0
    %969 = vmatpush2.msra.mxu0 0.0
    %970 = vmatprep.subr.mxu0 0.0
    %971 = vmatpush2.msra.mxu0 0.0
    %972 = vmatprep.subr.mxu0 0.0
    %973 = vmatpush2.msra.mxu0 0.0
    %974 = vmatprep.mubr.f32.mxu0 0.0
    %975 = vmatmul.mubr.f32.gmra.mxu0 %v877
    %v976 = vpop.f32.mrf.mxu0
    %v977 = vadd.f32 %v875, %v976
    %v978 = vpop.f32.mrf.mxu0
    %979 = vmatprep.mubr.f32.mxu0 0.0
    %980 = vmatmul.mubr.f32.gmra.mxu0 %v880
    %v981 = vpop.f32.mrf.mxu0
    %v982 = vadd.f32 %v875, %v981
    %v983 = vpop.f32.mrf.mxu0
    %984 = vmatprep.mubr.f32.mxu0 0.0
    %985 = vmatmul.mubr.f32.gmra.mxu0 %v883
    %v986 = vpop.f32.mrf.mxu0
    %v987 = vadd.f32 %v875, %v986
    %v988 = vpop.f32.mrf.mxu0
    %989 = vmatprep.mubr.f32.mxu0 0.0
    %990 = vmatmul.mubr.f32.gmra.mxu0 %v886
    %v991 = vpop.f32.mrf.mxu0
    %v992 = vadd.f32 %v875, %v991
    %v993 = vpop.f32.mrf.mxu0
    %994 = vmatprep.mubr.f32.mxu0 0.0
    %995 = vmatmul.mubr.f32.gmra.mxu0 %v889
    %v996 = vpop.f32.mrf.mxu0
    %v997 = vadd.f32 %v875, %v996
    %v998 = vpop.f32.mrf.mxu0
    %999 = vmatprep.mubr.f32.mxu0 0.0
    %1000 = vmatmul.mubr.f32.gmra.mxu0 %v892
    %v1001 = vpop.f32.mrf.mxu0
    %v1002 = vadd.f32 %v875, %v1001
    %v1003 = vpop.f32.mrf.mxu0
    %1004 = vmatprep.mubr.f32.mxu0 0.0
    %1005 = vmatmul.mubr.f32.gmra.mxu0 %v895
    %v1006 = vpop.f32.mrf.mxu0
    %v1007 = vadd.f32 %v875, %v1006
    %v1008 = vpop.f32.mrf.mxu0
    %1009 = vmatprep.mubr.f32.mxu0 0.0
    %1010 = vmatmul.mubr.f32.gmra.mxu0 %v898
    %v1011 = vpop.f32.mrf.mxu0
    %v1012 = vadd.f32 %v875, %v1011
    %v1013 = vpop.f32.mrf.mxu0
    %1014 = vmatprep.mubr.f32.mxu0 0.0
    %1015 = vmatmul.mubr.f32.gmra.mxu0 %v901
    %v1016 = vpop.f32.mrf.mxu0
    %v1017 = vadd.f32 %v875, %v1016
    %v1018 = vpop.f32.mrf.mxu0
    %1019 = vmatprep.mubr.f32.mxu0 0.0
    %1020 = vmatmul.mubr.f32.gmra.mxu0 %v904
    %v1021 = vpop.f32.mrf.mxu0
    %v1022 = vadd.f32 %v875, %v1021
    %v1023 = vpop.f32.mrf.mxu0
    %1024 = vdwg.mxu0
    %v1025 = vld [vmem:[%s2 + $0x8] sm:$0x1]
    %v1026 = vld [vmem:[%s2 + $0x9] sm:$0x1]
    %v1027 = vsel %vm280, %v977, 0.0
    %v1028 = vsel %vm280, %v982, 0.0
    %v1029 = vadd.f32 %v1027, %v1028
    %v1030 = vsel %vm280, %v987, 0.0
    %v1031 = vadd.f32 %v1029, %v1030
    %v1032 = vsel %vm280, %v992, 0.0
    %v1033 = vadd.f32 %v1031, %v1032
    %v1034 = vsel %vm280, %v997, 0.0
    %v1035 = vadd.f32 %v1033, %v1034
    %v1036 = vsel %vm280, %v1002, 0.0
    %v1037 = vadd.f32 %v1035, %v1036
    %v1038 = vsel %vm280, %v1007, 0.0
    %v1039 = vadd.f32 %v1037, %v1038
    %v1040 = vsel %vm280, %v1012, 0.0
    %v1041 = vadd.f32 %v1039, %v1040
    %v1042 = vsel %vm280, %v1017, 0.0
    %v1043 = vadd.f32 %v1041, %v1042
    %v1044 = vsel %vm280, %v1022, 0.0
    %v1045 = vadd.f32 %v1043, %v1044
    %v1046 = vrot.slane %v1045, 4
    %v1047 = vadd.f32 %v1045, %v1046
    %v1048 = vrot.slane %v1047, 2
    %v1049 = vadd.f32 %v1047, %v1048
    %v1050 = vrot.slane %v1049, 1
    %v1051 = vadd.f32 %v1049, %v1050
    %v1052 = vmul.f32 %v1051, %v782
    %v1053 = vsub.f32 %v977, %v1052
    %v1054 = vsub.f32 %v982, %v1052
    %v1055 = vsub.f32 %v987, %v1052
    %v1056 = vsub.f32 %v992, %v1052
    %v1057 = vsub.f32 %v997, %v1052
    %v1058 = vsub.f32 %v1002, %v1052
    %v1059 = vsub.f32 %v1007, %v1052
    %v1060 = vsub.f32 %v1012, %v1052
    %v1061 = vsub.f32 %v1017, %v1052
    %v1062 = vsub.f32 %v1022, %v1052
    %v1063 = vmul.f32 %v1053, %v1053
    %v1064 = vmul.f32 %v1054, %v1054
    %v1065 = vmul.f32 %v1055, %v1055
    %v1066 = vmul.f32 %v1056, %v1056
    %v1067 = vmul.f32 %v1057, %v1057
    %v1068 = vmul.f32 %v1058, %v1058
    %v1069 = vmul.f32 %v1059, %v1059
    %v1070 = vmul.f32 %v1060, %v1060
    %v1071 = vmul.f32 %v1061, %v1061
    %v1072 = vmul.f32 %v1062, %v1062
    %v1073 = vsel %vm280, %v1063, 0.0
    %v1074 = vsel %vm280, %v1064, 0.0
    %v1075 = vadd.f32 %v1073, %v1074
    %v1076 = vsel %vm280, %v1065, 0.0
    %v1077 = vadd.f32 %v1075, %v1076
    %v1078 = vsel %vm280, %v1066, 0.0
    %v1079 = vadd.f32 %v1077, %v1078
    %v1080 = vsel %vm280, %v1067, 0.0
    %v1081 = vadd.f32 %v1079, %v1080
    %v1082 = vsel %vm280, %v1068, 0.0
    %v1083 = vadd.f32 %v1081, %v1082
    %v1084 = vsel %vm280, %v1069, 0.0
    %v1085 = vadd.f32 %v1083, %v1084
    %v1086 = vsel %vm280, %v1070, 0.0
    %v1087 = vadd.f32 %v1085, %v1086
    %v1088 = vsel %vm280, %v1071, 0.0
    %v1089 = vadd.f32 %v1087, %v1088
    %v1090 = vsel %vm280, %v1072, 0.0
    %v1091 = vadd.f32 %v1089, %v1090
    %v1092 = vrot.slane %v1091, 4
    %v1093 = vadd.f32 %v1091, %v1092
    %v1094 = vrot.slane %v1093, 2
    %v1095 = vadd.f32 %v1093, %v1094
    %v1096 = vrot.slane %v1095, 1
    %v1097 = vadd.f32 %v1095, %v1096
    %v1098 = vmul.f32 %v1097, %v782
    %v1099 = vadd.f32 %v1098, 1e-05
    %v1100 = vrsqrt.pop %v1099
    %v1101 = vmul.f32 %v1053, %v1100
    %v1102 = vmul.f32 %v1054, %v1100
    %v1103 = vmul.f32 %v1055, %v1100
    %v1104 = vmul.f32 %v1056, %v1100
    %v1105 = vmul.f32 %v1057, %v1100
    %v1106 = vmul.f32 %v1058, %v1100
    %v1107 = vmul.f32 %v1059, %v1100
    %v1108 = vmul.f32 %v1060, %v1100
    %v1109 = vmul.f32 %v1061, %v1100
    %v1110 = vmul.f32 %v1062, %v1100
    %v1111 = vlaneseq
    %v1112 = vshrl.u32 %v1111, 7
    %v1113 = vsub.s32 0, %v1112
    %v1114 = vrot.slane %v1025, %v1113
    %v1115 = vmul.f32 %v1101, %v1114
    %v1116 = vmul.f32 %v1102, %v1114
    %v1117 = vmul.f32 %v1103, %v1114
    %v1118 = vmul.f32 %v1104, %v1114
    %v1119 = vmul.f32 %v1105, %v1114
    %v1120 = vmul.f32 %v1106, %v1114
    %v1121 = vmul.f32 %v1107, %v1114
    %v1122 = vmul.f32 %v1108, %v1114
    %v1123 = vmul.f32 %v1109, %v1114
    %v1124 = vmul.f32 %v1110, %v1114
    %v1125 = vlaneseq
    %v1126 = vshrl.u32 %v1125, 7
    %v1127 = vsub.s32 0, %v1126
    %v1128 = vrot.slane %v1026, %v1127
    %v1129 = vadd.f32 %v1115, %v1128
    %v1130 = vadd.f32 %v1116, %v1128
    %v1131 = vadd.f32 %v1117, %v1128
    %v1132 = vadd.f32 %v1118, %v1128
    %v1133 = vadd.f32 %v1119, %v1128
    %v1134 = vadd.f32 %v1120, %v1128
    %v1135 = vadd.f32 %v1121, %v1128
    %v1136 = vadd.f32 %v1122, %v1128
    %v1137 = vadd.f32 %v1123, %v1128
    %v1138 = vadd.f32 %v1124, %v1128
    %v1139 = vmax.f32 %v1129, 0.0
    %v1140 = vmax.f32 %v1130, 0.0
    %v1141 = vmax.f32 %v1131, 0.0
    %v1142 = vmax.f32 %v1132, 0.0
    %v1143 = vmax.f32 %v1133, 0.0
    %v1144 = vmax.f32 %v1134, 0.0
    %v1145 = vmax.f32 %v1135, 0.0
    %v1146 = vmax.f32 %v1136, 0.0
    %v1147 = vmax.f32 %v1137, 0.0
    %v1148 = vmax.f32 %v1138, 0.0
    %v1149 = vmul.u32 %v384, 10
    %vm1150 = vcmp.ge.s32.totalorder %v386, %v1149
    %v1151 = vmul.u32 %v389, 10
    %vm1152 = vcmp.lt.s32.totalorder %v386, %v1151
    %vm1153 = vmand %vm1150, %vm1152
    %v1154 = vsel %vm1153, 0.1, 0.0
    %vm1155 = vcmask 654336
    %v1157 = vsel %vm1155, %v1154, 0
    %1159 = vmatprep.subr.mxu0 0.0
    %1160 = vmatpush1.msra.mxu0 0.0
    %1161 = vmatprep.subr.mxu0 0.0
    %1162 = vmatpush1.msra.mxu0 0.0
    %1163 = vmatprep.subr.mxu0 0.0
    %1164 = vmatpush1.msra.mxu0 0.0
    %1165 = vmatprep.subr.mxu0 0.0
    %1166 = vmatpush1.msra.mxu0 0.0
    %1167 = vmatprep.subr.mxu0 0.0
    %1168 = vmatpush1.msra.mxu0 0.0
    %1169 = vmatprep.subr.mxu0 0.0
    %1170 = vmatpush1.msra.mxu0 0.0
    %1171 = vmatprep.subr.mxu0 0.0
    %1172 = vmatpush1.msra.mxu0 %v1148
    %1173 = vmatprep.subr.mxu0 0.0
    %1174 = vmatpush1.msra.mxu0 %v1147
    %1175 = vmatprep.subr.mxu0 0.0
    %1176 = vmatpush1.msra.mxu0 %v1146
    %1177 = vmatprep.subr.mxu0 0.0
    %1178 = vmatpush1.msra.mxu0 %v1145
    %1179 = vmatprep.subr.mxu0 0.0
    %1180 = vmatpush1.msra.mxu0 %v1144
    %1181 = vmatprep.subr.mxu0 0.0
    %1182 = vmatpush1.msra.mxu0 %v1143
    %1183 = vmatprep.subr.mxu0 0.0
    %1184 = vmatpush1.msra.mxu0 %v1142
    %1185 = vmatprep.subr.mxu0 0.0
    %1186 = vmatpush1.msra.mxu0 %v1141
    %1187 = vmatprep.subr.mxu0 0.0
    %1188 = vmatpush1.msra.mxu0 %v1140
    %1189 = vmatprep.subr.mxu0 0.0
    %1190 = vmatpush1.msra.mxu0 %v1139
    %1191 = vmatprep.subr.mxu0 0.0
    %1192 = vmatpush2.msra.mxu0 0.0
    %1193 = vmatprep.subr.mxu0 0.0
    %1194 = vmatpush2.msra.mxu0 0.0
    %1195 = vmatprep.subr.mxu0 0.0
    %1196 = vmatpush2.msra.mxu0 0.0
    %1197 = vmatprep.subr.mxu0 0.0
    %1198 = vmatpush2.msra.mxu0 0.0
    %1199 = vmatprep.subr.mxu0 0.0
    %1200 = vmatpush2.msra.mxu0 0.0
    %1201 = vmatprep.subr.mxu0 0.0
    %1202 = vmatpush2.msra.mxu0 0.0
    %1203 = vmatprep.subr.mxu0 0.0
    %1204 = vmatpush2.msra.mxu0 0.0
    %1205 = vmatprep.subr.mxu0 0.0
    %1206 = vmatpush2.msra.mxu0 0.0
    %1207 = vmatprep.subr.mxu0 0.0
    %1208 = vmatpush2.msra.mxu0 0.0
    %1209 = vmatprep.subr.mxu0 0.0
    %1210 = vmatpush2.msra.mxu0 0.0
    %1211 = vmatprep.subr.mxu0 0.0
    %1212 = vmatpush2.msra.mxu0 0.0
    %1213 = vmatprep.subr.mxu0 0.0
    %1214 = vmatpush2.msra.mxu0 0.0
    %1215 = vmatprep.subr.mxu0 0.0
    %1216 = vmatpush2.msra.mxu0 0.0
    %1217 = vmatprep.subr.mxu0 0.0
    %1218 = vmatpush2.msra.mxu0 0.0
    %1219 = vmatprep.subr.mxu0 0.0
    %1220 = vmatpush2.msra.mxu0 0.0
    %1221 = vmatprep.subr.mxu0 0.0
    %1222 = vmatpush2.msra.mxu0 0.0
    %1223 = vmatprep.mubr.f32.mxu0 0.0
    %1224 = vmatmul.mubr.f32.gmra.mxu0 %v1157
    %v1225 = vpop.f32.mrf.mxu0
    %v1226 = vadd.f32 0.0, %v1225
    %v1227 = vpop.f32.mrf.mxu0
    %1228 = vdwg.mxu0
    %v1229 = vld [vmem:[%s6] sm:$0xff]
    %v1230 = vld [vmem:[%s6 + $0x8] sm:$0xff]
    %v1231 = vld [vmem:[%s2 + $0xb] sm:$0x1]
    %v1232 = vlaneseq
    %v1233 = vshrl.u32 %v1232, 7
    %v1234 = vsub.s32 0, %v1233
    %v1235 = vrot.slane %v1231, %v1234
    %v1237 = vsel %vm280, %v1226, 0
    %1239 = vmatprep.subr.mxu0 0.0
    %1240 = vmatpush1.msra.mxu0 0.0
    %1241 = vmatprep.subr.mxu0 0.0
    %1242 = vmatpush1.msra.mxu0 0.0
    %1243 = vmatprep.subr.mxu0 0.0
    %1244 = vmatpush1.msra.mxu0 0.0
    %1245 = vmatprep.subr.mxu0 0.0
    %1246 = vmatpush1.msra.mxu0 0.0
    %1247 = vmatprep.subr.mxu0 0.0
    %1248 = vmatpush1.msra.mxu0 0.0
    %1249 = vmatprep.subr.mxu0 0.0
    %1250 = vmatpush1.msra.mxu0 0.0
    %1251 = vmatprep.subr.mxu0 0.0
    %1252 = vmatpush1.msra.mxu0 0.0
    %1253 = vmatprep.subr.mxu0 0.0
    %1254 = vmatpush1.msra.mxu0 0.0
    %1255 = vmatprep.subr.mxu0 0.0
    %1256 = vmatpush1.msra.mxu0 0.0
    %1257 = vmatprep.subr.mxu0 0.0
    %1258 = vmatpush1.msra.mxu0 0.0
    %1259 = vmatprep.subr.mxu0 0.0
    %1260 = vmatpush1.msra.mxu0 0.0
    %1261 = vmatprep.subr.mxu0 0.0
    %1262 = vmatpush1.msra.mxu0 0.0
    %1263 = vmatprep.subr.mxu0 0.0
    %1264 = vmatpush1.msra.mxu0 0.0
    %1265 = vmatprep.subr.mxu0 0.0
    %1266 = vmatpush1.msra.mxu0 0.0
    %1267 = vmatprep.subr.mxu0 0.0
    %1268 = vmatpush1.msra.mxu0 %v1230
    %1269 = vmatprep.subr.mxu0 0.0
    %1270 = vmatpush1.msra.mxu0 %v1229
    %1271 = vmatprep.subr.mxu0 0.0
    %1272 = vmatpush2.msra.mxu0 0.0
    %1273 = vmatprep.subr.mxu0 0.0
    %1274 = vmatpush2.msra.mxu0 0.0
    %1275 = vmatprep.subr.mxu0 0.0
    %1276 = vmatpush2.msra.mxu0 0.0
    %1277 = vmatprep.subr.mxu0 0.0
    %1278 = vmatpush2.msra.mxu0 0.0
    %1279 = vmatprep.subr.mxu0 0.0
    %1280 = vmatpush2.msra.mxu0 0.0
    %1281 = vmatprep.subr.mxu0 0.0
    %1282 = vmatpush2.msra.mxu0 0.0
    %1283 = vmatprep.subr.mxu0 0.0
    %1284 = vmatpush2.msra.mxu0 0.0
    %1285 = vmatprep.subr.mxu0 0.0
    %1286 = vmatpush2.msra.mxu0 0.0
    %1287 = vmatprep.subr.mxu0 0.0
    %1288 = vmatpush2.msra.mxu0 0.0
    %1289 = vmatprep.subr.mxu0 0.0
    %1290 = vmatpush2.msra.mxu0 0.0
    %1291 = vmatprep.subr.mxu0 0.0
    %1292 = vmatpush2.msra.mxu0 0.0
    %1293 = vmatprep.subr.mxu0 0.0
    %1294 = vmatpush2.msra.mxu0 0.0
    %1295 = vmatprep.subr.mxu0 0.0
    %1296 = vmatpush2.msra.mxu0 0.0
    %1297 = vmatprep.subr.mxu0 0.0
    %1298 = vmatpush2.msra.mxu0 0.0
    %1299 = vmatprep.subr.mxu0 0.0
    %1300 = vmatpush2.msra.mxu0 0.0
    %1301 = vmatprep.subr.mxu0 0.0
    %1302 = vmatpush2.msra.mxu0 0.0
    %1303 = vmatprep.mubr.f32.mxu0 0.0
    %1304 = vmatmul.mubr.f32.gmra.mxu0 %v1237
    %v1305 = vpop.f32.mrf.mxu0
    %v1306 = vadd.f32 %v1235, %v1305
    %v1307 = vpop.f32.mrf.mxu0
    %1308 = vdwg.mxu0
    %v1309 = vmax.f32 %v1306, 0.0
    %v1311 = vsel %vm558, %v1309, 0
    %1313 = vmatprep.subr.mxu0 0.0
    %1314 = vmatpush1.msra.mxu0 0.0
    %1315 = vmatprep.subr.mxu0 0.0
    %1316 = vmatpush1.msra.mxu0 0.0
    %1317 = vmatprep.subr.mxu0 0.0
    %1318 = vmatpush1.msra.mxu0 0.0
    %1319 = vmatprep.subr.mxu0 0.0
    %1320 = vmatpush1.msra.mxu0 0.0
    %1321 = vmatprep.subr.mxu0 0.0
    %1322 = vmatpush1.msra.mxu0 0.0
    %1323 = vmatprep.subr.mxu0 0.0
    %1324 = vmatpush1.msra.mxu0 0.0
    %1325 = vmatprep.subr.mxu0 0.0
    %1326 = vmatpush1.msra.mxu0 0.0
    %1327 = vmatprep.subr.mxu0 0.0
    %1328 = vmatpush1.msra.mxu0 0.0
    %1329 = vmatprep.subr.mxu0 0.0
    %1330 = vmatpush1.msra.mxu0 0.0
    %1331 = vmatprep.subr.mxu0 0.0
    %1332 = vmatpush1.msra.mxu0 0.0
    %1333 = vmatprep.subr.mxu0 0.0
    %1334 = vmatpush1.msra.mxu0 0.0
    %1335 = vmatprep.subr.mxu0 0.0
    %1336 = vmatpush1.msra.mxu0 0.0
    %1337 = vmatprep.subr.mxu0 0.0
    %1338 = vmatpush1.msra.mxu0 %v552
    %1339 = vmatprep.subr.mxu0 0.0
    %1340 = vmatpush1.msra.mxu0 %v551
    %1341 = vmatprep.subr.mxu0 0.0
    %1342 = vmatpush1.msra.mxu0 %v550
    %1343 = vmatprep.subr.mxu0 0.0
    %1344 = vmatpush1.msra.mxu0 %v549
    %1345 = vmatprep.subr.mxu0 0.0
    %1346 = vmatpush2.msra.mxu0 0.0
    %1347 = vmatprep.subr.mxu0 0.0
    %1348 = vmatpush2.msra.mxu0 0.0
    %1349 = vmatprep.subr.mxu0 0.0
    %1350 = vmatpush2.msra.mxu0 0.0
    %1351 = vmatprep.subr.mxu0 0.0
    %1352 = vmatpush2.msra.mxu0 0.0
    %1353 = vmatprep.subr.mxu0 0.0
    %1354 = vmatpush2.msra.mxu0 0.0
    %1355 = vmatprep.subr.mxu0 0.0
    %1356 = vmatpush2.msra.mxu0 0.0
    %1357 = vmatprep.subr.mxu0 0.0
    %1358 = vmatpush2.msra.mxu0 0.0
    %1359 = vmatprep.subr.mxu0 0.0
    %1360 = vmatpush2.msra.mxu0 0.0
    %1361 = vmatprep.subr.mxu0 0.0
    %1362 = vmatpush2.msra.mxu0 0.0
    %1363 = vmatprep.subr.mxu0 0.0
    %1364 = vmatpush2.msra.mxu0 0.0
    %1365 = vmatprep.subr.mxu0 0.0
    %1366 = vmatpush2.msra.mxu0 0.0
    %1367 = vmatprep.subr.mxu0 0.0
    %1368 = vmatpush2.msra.mxu0 0.0
    %1369 = vmatprep.subr.mxu0 0.0
    %1370 = vmatpush2.msra.mxu0 0.0
    %1371 = vmatprep.subr.mxu0 0.0
    %1372 = vmatpush2.msra.mxu0 0.0
    %1373 = vmatprep.subr.mxu0 0.0
    %1374 = vmatpush2.msra.mxu0 0.0
    %1375 = vmatprep.subr.mxu0 0.0
    %1376 = vmatpush2.msra.mxu0 0.0
    %1377 = vmatprep.mubr.f32.mxu0 0.0
    %1378 = vmatmul.mubr.f32.gmra.mxu0 %v1311
    %v1379 = vpop.f32.mrf.mxu0
    %v1380 = vadd.f32 %v557, %v1379
    %v1381 = vpop.f32.mrf.mxu0
    %1382 = vdwg.mxu0
    %v1383 = vsel %vm558, %v1380, 0.0
    %v1384 = vrot.slane %v1383, 4
    %v1385 = vadd.f32 %v1383, %v1384
    %v1386 = vrot.slane %v1385, 2
    %v1387 = vadd.f32 %v1385, %v1386
    %v1388 = vrot.slane %v1387, 1
    %v1389 = vadd.f32 %v1387, %v1388
    %v1390 = vmul.f32 %v1389, %v641
    %v1391 = vsub.f32 %v1380, %v1390
    %v1392 = vmul.f32 %v1391, %v1391
    %v1393 = vsel %vm558, %v1392, 0.0
    %v1394 = vrot.slane %v1393, 4
    %v1395 = vadd.f32 %v1393, %v1394
    %v1396 = vrot.slane %v1395, 2
    %v1397 = vadd.f32 %v1395, %v1396
    %v1398 = vrot.slane %v1397, 1
    %v1399 = vadd.f32 %v1397, %v1398
    %v1400 = vmul.f32 %v1399, %v641
    %v1401 = vadd.f32 %v1400, 1e-05
    %v1402 = vrsqrt.pop %v1401
    %v1403 = vmul.f32 %v1391, %v1402
    %v1404 = vmul.f32 %v1403, %v659
    %v1405 = vadd.f32 %v1404, %v664
    %v1406 = vmax.f32 %v1405, 0.0
    %v1408 = vsel %vm558, %v1406, 0
    %1410 = vmatprep.subr.mxu0 0.0
    %1411 = vmatpush1.msra.mxu0 0.0
    %1412 = vmatprep.subr.mxu0 0.0
    %1413 = vmatpush1.msra.mxu0 0.0
    %1414 = vmatprep.subr.mxu0 0.0
    %1415 = vmatpush1.msra.mxu0 0.0
    %1416 = vmatprep.subr.mxu0 0.0
    %1417 = vmatpush1.msra.mxu0 0.0
    %1418 = vmatprep.subr.mxu0 0.0
    %1419 = vmatpush1.msra.mxu0 0.0
    %1420 = vmatprep.subr.mxu0 0.0
    %1421 = vmatpush1.msra.mxu0 0.0
    %1422 = vmatprep.subr.mxu0 0.0
    %1423 = vmatpush1.msra.mxu0 0.0
    %1424 = vmatprep.subr.mxu0 0.0
    %1425 = vmatpush1.msra.mxu0 0.0
    %1426 = vmatprep.subr.mxu0 0.0
    %1427 = vmatpush1.msra.mxu0 0.0
    %1428 = vmatprep.subr.mxu0 0.0
    %1429 = vmatpush1.msra.mxu0 0.0
    %1430 = vmatprep.subr.mxu0 0.0
    %1431 = vmatpush1.msra.mxu0 0.0
    %1432 = vmatprep.subr.mxu0 0.0
    %1433 = vmatpush1.msra.mxu0 0.0
    %1434 = vmatprep.subr.mxu0 0.0
    %1435 = vmatpush1.msra.mxu0 %v670
    %1436 = vmatprep.subr.mxu0 0.0
    %1437 = vmatpush1.msra.mxu0 %v669
    %1438 = vmatprep.subr.mxu0 0.0
    %1439 = vmatpush1.msra.mxu0 %v668
    %1440 = vmatprep.subr.mxu0 0.0
    %1441 = vmatpush1.msra.mxu0 %v667
    %1442 = vmatprep.subr.mxu0 0.0
    %1443 = vmatpush2.msra.mxu0 0.0
    %1444 = vmatprep.subr.mxu0 0.0
    %1445 = vmatpush2.msra.mxu0 0.0
    %1446 = vmatprep.subr.mxu0 0.0
    %1447 = vmatpush2.msra.mxu0 0.0
    %1448 = vmatprep.subr.mxu0 0.0
    %1449 = vmatpush2.msra.mxu0 0.0
    %1450 = vmatprep.subr.mxu0 0.0
    %1451 = vmatpush2.msra.mxu0 0.0
    %1452 = vmatprep.subr.mxu0 0.0
    %1453 = vmatpush2.msra.mxu0 0.0
    %1454 = vmatprep.subr.mxu0 0.0
    %1455 = vmatpush2.msra.mxu0 0.0
    %1456 = vmatprep.subr.mxu0 0.0
    %1457 = vmatpush2.msra.mxu0 0.0
    %1458 = vmatprep.subr.mxu0 0.0
    %1459 = vmatpush2.msra.mxu0 0.0
    %1460 = vmatprep.subr.mxu0 0.0
    %1461 = vmatpush2.msra.mxu0 0.0
    %1462 = vmatprep.subr.mxu0 0.0
    %1463 = vmatpush2.msra.mxu0 0.0
    %1464 = vmatprep.subr.mxu0 0.0
    %1465 = vmatpush2.msra.mxu0 0.0
    %1466 = vmatprep.subr.mxu0 0.0
    %1467 = vmatpush2.msra.mxu0 0.0
    %1468 = vmatprep.subr.mxu0 0.0
    %1469 = vmatpush2.msra.mxu0 0.0
    %1470 = vmatprep.subr.mxu0 0.0
    %1471 = vmatpush2.msra.mxu0 0.0
    %1472 = vmatprep.subr.mxu0 0.0
    %1473 = vmatpush2.msra.mxu0 0.0
    %1474 = vmatprep.mubr.f32.mxu0 0.0
    %1475 = vmatmul.mubr.f32.gmra.mxu0 %v1408
    %v1476 = vpop.f32.mrf.mxu0
    %v1477 = vadd.f32 0.0, %v1476
    %v1478 = vpop.f32.mrf.mxu0
    %1479 = vdwg.mxu0
    %v1480 = vsub.f32 %v741, %v1477
    %v1481 = vmul.f32 %v1480, %v1480
    %v1482 = vsel %vm280, %v1481, 0.0
    %1483 = vadd.xlane.f32.xlu0 %v1482
    %v1484 = vpop.xlane.xlu0 %1483
    %v1485 = vrot.slane %v1484, 4
    %v1486 = vadd.f32 %v1484, %v1485
    %v1487 = vrot.slane %v1486, 2
    %v1488 = vadd.f32 %v1486, %v1487
    %v1489 = vrot.slane %v1488, 1
    %v1490 = vadd.f32 %v1488, %v1489
    %s1491 = vtos %v1490
    %v1492 = vrcp.pop 128.0
    %s1493 = vtos %v1492
    %s1494 = smul.f32 %s1491, %s1493
    %v1495 = vsel %vm280, %v741, 0.0
    %v1496 = vrot.slane %v1495, 4
    %v1497 = vadd.f32 %v1495, %v1496
    %v1498 = vrot.slane %v1497, 2
    %v1499 = vadd.f32 %v1497, %v1498
    %v1500 = vrot.slane %v1499, 1
    %v1501 = vadd.f32 %v1499, %v1500
    %v1502 = vmul.f32 %v1501, %v641
    %v1503 = vsub.f32 %v741, %v1502
    %v1504 = vsel %vm280, %v1477, 0.0
    %v1505 = vrot.slane %v1504, 4
    %v1506 = vadd.f32 %v1504, %v1505
    %v1507 = vrot.slane %v1506, 2
    %v1508 = vadd.f32 %v1506, %v1507
    %v1509 = vrot.slane %v1508, 1
    %v1510 = vadd.f32 %v1508, %v1509
    %v1511 = vmul.f32 %v1510, %v641
    %v1512 = vsub.f32 %v1477, %v1511
    %v1513 = vmul.f32 %v1503, %v1503
    %v1514 = vsel %vm280, %v1513, 0.0
    %v1515 = vrot.slane %v1514, 4
    %v1516 = vadd.f32 %v1514, %v1515
    %v1517 = vrot.slane %v1516, 2
    %v1518 = vadd.f32 %v1516, %v1517
    %v1519 = vrot.slane %v1518, 1
    %v1520 = vadd.f32 %v1518, %v1519
    %v1521 = vmul.f32 %v1512, %v1512
    %v1522 = vsel %vm280, %v1521, 0.0
    %v1523 = vrot.slane %v1522, 4
    %v1524 = vadd.f32 %v1522, %v1523
    %v1525 = vrot.slane %v1524, 2
    %v1526 = vadd.f32 %v1524, %v1525
    %v1527 = vrot.slane %v1526, 1
    %v1528 = vadd.f32 %v1526, %v1527
    %v1529 = vrcp.pop 7.0
    %v1530 = vmul.f32 %v1520, %v1529
    %v1531 = vadd.f32 %v1530, 0.0001
    %v1532 = vrsqrt.pop %v1531
    %v1533 = vmul.f32 %v1531, %v1532
    %vm1534 = vcmp.eq.f32.partialorder %v1531, inf
    %v1535 = vsel %vm1534, %v1531, %v1533
    %vm1536 = vcmp.eq.f32.partialorder %v1531, 0.0
    %v1537 = vand.u32 %v1531, 2147483648
    %v1538 = vsel %vm1536, %v1537, %v1535
    %v1539 = vmul.f32 %v1528, %v1529
    %v1540 = vadd.f32 %v1539, 0.0001
    %v1541 = vrsqrt.pop %v1540
    %v1542 = vmul.f32 %v1540, %v1541
    %vm1543 = vcmp.eq.f32.partialorder %v1540, inf
    %v1544 = vsel %vm1543, %v1540, %v1542
    %vm1545 = vcmp.eq.f32.partialorder %v1540, 0.0
    %v1546 = vand.u32 %v1540, 2147483648
    %v1547 = vsel %vm1545, %v1546, %v1544
    %v1548 = vsub.f32 1.0, %v1538
    %v1549 = vmax.f32 %v1548, 0.0
    %vm1550 = vcmask 122880
    %v1551 = vsel %vm1550, %v1549, 0.0
    %1552 = vadd.xlane.f32.xlu0 %v1551
    %v1553 = vpop.xlane.xlu0 %1552
    %v1554 = vrot.slane %v1553, 4
    %v1555 = vadd.f32 %v1553, %v1554
    %v1556 = vrot.slane %v1555, 2
    %v1557 = vadd.f32 %v1555, %v1556
    %v1558 = vrot.slane %v1557, 1
    %v1559 = vadd.f32 %v1557, %v1558
    %s1560 = vtos %v1559
    %v1561 = vrcp.pop 16.0
    %s1562 = vtos %v1561
    %s1563 = smul.f32 %s1560, %s1562
    %v1564 = vrcp.pop 2.0
    %s1565 = vtos %v1564
    %s1566 = smul.f32 %s1563, %s1565
    %v1567 = vsub.f32 1.0, %v1547
    %v1568 = vmax.f32 %v1567, 0.0
    %v1569 = vsel %vm1550, %v1568, 0.0
    %1570 = vadd.xlane.f32.xlu0 %v1569
    %v1571 = vpop.xlane.xlu0 %1570
    %v1572 = vrot.slane %v1571, 4
    %v1573 = vadd.f32 %v1571, %v1572
    %v1574 = vrot.slane %v1573, 2
    %v1575 = vadd.f32 %v1573, %v1574
    %v1576 = vrot.slane %v1575, 1
    %v1577 = vadd.f32 %v1575, %v1576
    %s1578 = vtos %v1577
    %v1579 = vrcp.pop 16.0
    %s1580 = vtos %v1579
    %s1581 = smul.f32 %s1578, %s1580
    %v1582 = vrcp.pop 2.0
    %s1583 = vtos %v1582
    %s1584 = smul.f32 %s1581, %s1583
    %s1585 = sadd.f32 %s1566, %s1584
    %v1587 = vsel %vm280, %v1503, 0
    %1589 = vmatprep.subr.mxu0 0.0
    %1590 = vmatpush1.xpose.msra.mxu0 0.0
    %1591 = vmatprep.subr.mxu0 0.0
    %1592 = vmatpush1.xpose.msra.mxu0 0.0
    %1593 = vmatprep.subr.mxu0 0.0
    %1594 = vmatpush1.xpose.msra.mxu0 0.0
    %1595 = vmatprep.subr.mxu0 0.0
    %1596 = vmatpush1.xpose.msra.mxu0 0.0
    %1597 = vmatprep.subr.mxu0 0.0
    %1598 = vmatpush1.xpose.msra.mxu0 0.0
    %1599 = vmatprep.subr.mxu0 0.0
    %1600 = vmatpush1.xpose.msra.mxu0 0.0
    %1601 = vmatprep.subr.mxu0 0.0
    %1602 = vmatpush1.xpose.msra.mxu0 0.0
    %1603 = vmatprep.subr.mxu0 0.0
    %1604 = vmatpush1.xpose.msra.mxu0 0.0
    %1605 = vmatprep.subr.mxu0 0.0
    %1606 = vmatpush1.xpose.msra.mxu0 0.0
    %1607 = vmatprep.subr.mxu0 0.0
    %1608 = vmatpush1.xpose.msra.mxu0 0.0
    %1609 = vmatprep.subr.mxu0 0.0
    %1610 = vmatpush1.xpose.msra.mxu0 0.0
    %1611 = vmatprep.subr.mxu0 0.0
    %1612 = vmatpush1.xpose.msra.mxu0 0.0
    %1613 = vmatprep.subr.mxu0 0.0
    %1614 = vmatpush1.xpose.msra.mxu0 0.0
    %1615 = vmatprep.subr.mxu0 0.0
    %1616 = vmatpush1.xpose.msra.mxu0 0.0
    %1617 = vmatprep.subr.mxu0 0.0
    %1618 = vmatpush1.xpose.msra.mxu0 0.0
    %1619 = vmatprep.subr.mxu0 0.0
    %1620 = vmatpush1.xpose.msra.mxu0 %v1587
    %1621 = vmatprep.subr.mxu0 0.0
    %1622 = vmatpush2.xpose.msra.mxu0 0.0
    %1623 = vmatprep.subr.mxu0 0.0
    %1624 = vmatpush2.xpose.msra.mxu0 0.0
    %1625 = vmatprep.subr.mxu0 0.0
    %1626 = vmatpush2.xpose.msra.mxu0 0.0
    %1627 = vmatprep.subr.mxu0 0.0
    %1628 = vmatpush2.xpose.msra.mxu0 0.0
    %1629 = vmatprep.subr.mxu0 0.0
    %1630 = vmatpush2.xpose.msra.mxu0 0.0
    %1631 = vmatprep.subr.mxu0 0.0
    %1632 = vmatpush2.xpose.msra.mxu0 0.0
    %1633 = vmatprep.subr.mxu0 0.0
    %1634 = vmatpush2.xpose.msra.mxu0 0.0
    %1635 = vmatprep.subr.mxu0 0.0
    %1636 = vmatpush2.xpose.msra.mxu0 0.0
    %1637 = vmatprep.subr.mxu0 0.0
    %1638 = vmatpush2.xpose.msra.mxu0 0.0
    %1639 = vmatprep.subr.mxu0 0.0
    %1640 = vmatpush2.xpose.msra.mxu0 0.0
    %1641 = vmatprep.subr.mxu0 0.0
    %1642 = vmatpush2.xpose.msra.mxu0 0.0
    %1643 = vmatprep.subr.mxu0 0.0
    %1644 = vmatpush2.xpose.msra.mxu0 0.0
    %1645 = vmatprep.subr.mxu0 0.0
    %1646 = vmatpush2.xpose.msra.mxu0 0.0
    %1647 = vmatprep.subr.mxu0 0.0
    %1648 = vmatpush2.xpose.msra.mxu0 0.0
    %1649 = vmatprep.subr.mxu0 0.0
    %1650 = vmatpush2.xpose.msra.mxu0 0.0
    %1651 = vmatprep.subr.mxu0 0.0
    %1652 = vmatpush2.xpose.msra.mxu0 0.0
    %1653 = vmatprep.mubr.f32.mxu0 0.0
    %1654 = vmatmul.mubr.f32.gmra.mxu0 %v1587
    %v1655 = vpop.f32.mrf.mxu0
    %v1656 = vadd.f32 0.0, %v1655
    %v1657 = vpop.f32.mrf.mxu0
    %1658 = vdwg.mxu0
    %v1660 = vsel %vm280, %v1512, 0
    %1662 = vmatprep.subr.mxu0 0.0
    %1663 = vmatpush1.xpose.msra.mxu0 0.0
    %1664 = vmatprep.subr.mxu0 0.0
    %1665 = vmatpush1.xpose.msra.mxu0 0.0
    %1666 = vmatprep.subr.mxu0 0.0
    %1667 = vmatpush1.xpose.msra.mxu0 0.0
    %1668 = vmatprep.subr.mxu0 0.0
    %1669 = vmatpush1.xpose.msra.mxu0 0.0
    %1670 = vmatprep.subr.mxu0 0.0
    %1671 = vmatpush1.xpose.msra.mxu0 0.0
    %1672 = vmatprep.subr.mxu0 0.0
    %1673 = vmatpush1.xpose.msra.mxu0 0.0
    %1674 = vmatprep.subr.mxu0 0.0
    %1675 = vmatpush1.xpose.msra.mxu0 0.0
    %1676 = vmatprep.subr.mxu0 0.0
    %1677 = vmatpush1.xpose.msra.mxu0 0.0
    %1678 = vmatprep.subr.mxu0 0.0
    %1679 = vmatpush1.xpose.msra.mxu0 0.0
    %1680 = vmatprep.subr.mxu0 0.0
    %1681 = vmatpush1.xpose.msra.mxu0 0.0
    %1682 = vmatprep.subr.mxu0 0.0
    %1683 = vmatpush1.xpose.msra.mxu0 0.0
    %1684 = vmatprep.subr.mxu0 0.0
    %1685 = vmatpush1.xpose.msra.mxu0 0.0
    %1686 = vmatprep.subr.mxu0 0.0
    %1687 = vmatpush1.xpose.msra.mxu0 0.0
    %1688 = vmatprep.subr.mxu0 0.0
    %1689 = vmatpush1.xpose.msra.mxu0 0.0
    %1690 = vmatprep.subr.mxu0 0.0
    %1691 = vmatpush1.xpose.msra.mxu0 0.0
    %1692 = vmatprep.subr.mxu0 0.0
    %1693 = vmatpush1.xpose.msra.mxu0 %v1660
    %1694 = vmatprep.subr.mxu0 0.0
    %1695 = vmatpush2.xpose.msra.mxu0 0.0
    %1696 = vmatprep.subr.mxu0 0.0
    %1697 = vmatpush2.xpose.msra.mxu0 0.0
    %1698 = vmatprep.subr.mxu0 0.0
    %1699 = vmatpush2.xpose.msra.mxu0 0.0
    %1700 = vmatprep.subr.mxu0 0.0
    %1701 = vmatpush2.xpose.msra.mxu0 0.0
    %1702 = vmatprep.subr.mxu0 0.0
    %1703 = vmatpush2.xpose.msra.mxu0 0.0
    %1704 = vmatprep.subr.mxu0 0.0
    %1705 = vmatpush2.xpose.msra.mxu0 0.0
    %1706 = vmatprep.subr.mxu0 0.0
    %1707 = vmatpush2.xpose.msra.mxu0 0.0
    %1708 = vmatprep.subr.mxu0 0.0
    %1709 = vmatpush2.xpose.msra.mxu0 0.0
    %1710 = vmatprep.subr.mxu0 0.0
    %1711 = vmatpush2.xpose.msra.mxu0 0.0
    %1712 = vmatprep.subr.mxu0 0.0
    %1713 = vmatpush2.xpose.msra.mxu0 0.0
    %1714 = vmatprep.subr.mxu0 0.0
    %1715 = vmatpush2.xpose.msra.mxu0 0.0
    %1716 = vmatprep.subr.mxu0 0.0
    %1717 = vmatpush2.xpose.msra.mxu0 0.0
    %1718 = vmatprep.subr.mxu0 0.0
    %1719 = vmatpush2.xpose.msra.mxu0 0.0
    %1720 = vmatprep.subr.mxu0 0.0
    %1721 = vmatpush2.xpose.msra.mxu0 0.0
    %1722 = vmatprep.subr.mxu0 0.0
    %1723 = vmatpush2.xpose.msra.mxu0 0.0
    %1724 = vmatprep.subr.mxu0 0.0
    %1725 = vmatpush2.xpose.msra.mxu0 0.0
    %1726 = vmatprep.mubr.f32.mxu0 0.0
    %1727 = vmatmul.mubr.f32.gmra.mxu0 %v1660
    %v1728 = vpop.f32.mrf.mxu0
    %v1729 = vadd.f32 0.0, %v1728
    %v1730 = vpop.f32.mrf.mxu0
    %1731 = vdwg.mxu0
    %v1732 = vmul.f32 %v1656, %v1656
    %vm1733 = vcmask 64512
    %v1734 = vsel %vm1733, %v1732, 0.0
    %1735 = vadd.xlane.f32.xlu0 %v1734
    %v1736 = vpop.xlane.xlu0 %1735
    %v1737 = vrot.slane %v1736, 4
    %v1738 = vadd.f32 %v1736, %v1737
    %v1739 = vrot.slane %v1738, 2
    %v1740 = vadd.f32 %v1738, %v1739
    %v1741 = vrot.slane %v1740, 1
    %v1742 = vadd.f32 %v1740, %v1741
    %s1743 = vtos %v1742
    %v1744 = vmul.f32 %v1520, %v1520
    %v1745 = vsel %vm1550, %v1744, 0.0
    %1746 = vadd.xlane.f32.xlu0 %v1745
    %v1747 = vpop.xlane.xlu0 %1746
    %v1748 = vrot.slane %v1747, 4
    %v1749 = vadd.f32 %v1747, %v1748
    %v1750 = vrot.slane %v1749, 2
    %v1751 = vadd.f32 %v1749, %v1750
    %v1752 = vrot.slane %v1751, 1
    %v1753 = vadd.f32 %v1751, %v1752
    %s1754 = vtos %v1753
    %s1755 = ssub.f32 %s1743, %s1754
    %v1756 = vmul.f32 %v1729, %v1729
    %v1757 = vsel %vm1733, %v1756, 0.0
    %1758 = vadd.xlane.f32.xlu0 %v1757
    %v1759 = vpop.xlane.xlu0 %1758
    %v1760 = vrot.slane %v1759, 4
    %v1761 = vadd.f32 %v1759, %v1760
    %v1762 = vrot.slane %v1761, 2
    %v1763 = vadd.f32 %v1761, %v1762
    %v1764 = vrot.slane %v1763, 1
    %v1765 = vadd.f32 %v1763, %v1764
    %s1766 = vtos %v1765
    %v1767 = vmul.f32 %v1528, %v1528
    %v1768 = vsel %vm1550, %v1767, 0.0
    %1769 = vadd.xlane.f32.xlu0 %v1768
    %v1770 = vpop.xlane.xlu0 %1769
    %v1771 = vrot.slane %v1770, 4
    %v1772 = vadd.f32 %v1770, %v1771
    %v1773 = vrot.slane %v1772, 2
    %v1774 = vadd.f32 %v1772, %v1773
    %v1775 = vrot.slane %v1774, 1
    %v1776 = vadd.f32 %v1774, %v1775
    %s1777 = vtos %v1776
    %s1778 = ssub.f32 %s1766, %s1777
    %s1779 = sadd.f32 %s1755, %s1778
    %v1780 = vrcp.pop 784.0
    %s1781 = vtos %v1780
    %s1782 = smul.f32 %s1779, %s1781
    %s1783 = smul.f32 %s1494, 25.0
    %s1784 = smul.f32 %s1585, 25.0
    %s1785 = sadd.f32 %s1783, %s1784
    %s1786 = sadd.f32 %s1785, %s1782
    %v1787 = vstv %s1786
    %vm1788 = vcmask 0
    %1789 = vst.msk [vmem:[#allocation2] sm:$0x1] %vm1788, %v1787
    // Predicated region
    $region38: #{_lambda_.1} parent=1 // pred_check
      _
    $region39: #{_lambda_.1} parent=1 // pred_check_branch
      %1791 = sbr.rel (0) target = $region41
    $region40: #{_lambda_.1} parent=1 // pred_region
      %s1793 = ssub.s32 16, 16
      %1794 = vsyncadd [#allocation3], %s1793
      %s1796 = sshll.u32 [#allocation2], 4
      %s1797 = int_to_ptr.vmem [resolvable:$true] %s1796
      %1799 = dma.vmem_to_hbm [thread:$0]  %s1797, 16, %s9, [#allocation3]
    $region41: #{_lambda_.1} parent=1 // pred_fallthru
      _
    // Predicated region
    $region42: #{_lambda_.1} parent=1 // pred_check
      _
    $region43: #{_lambda_.1} parent=1 // pred_check_branch
      %1801 = sbr.rel (0) target = $region45
    $region44: #{_lambda_.1} parent=1 // pred_region
      %1802 = dma.done [#allocation3], 16
    $region45: #{_lambda_.1} parent=1 // pred_fallthru
      _
    %1803 = vsyncpa [#allocation3], 1

</llo_original>
